<compile_context>
chip_gen: v7x
topology: tpu7x:2x2x1
jax: 0.10.0
libtpu: 0.0.40
codegen_flags: <defaults>
</compile_context>

<pallas_src>
import functools

import jax
import jax.numpy as jnp
from jax.experimental import pallas as pl
from jax.experimental.pallas import tpu as pltpu


def _round_up(x, m):
    return ((x + m - 1) // m) * m


def _fused_mlp_kernel(*refs, num_linear):
    """Fused MLP over one batch tile.

    refs = (x_ref, w0, b0, w1, b1, ..., w_{L-1}, b_{L-1}, out_ref)
    x_ref / weights are bf16; accumulation, bias add and activations in f32.
    Intermediate activations never leave the chip.
    """
    x_ref = refs[0]
    out_ref = refs[-1]
    wb = refs[1:-1]

    h = x_ref[...]                                     # bf16 (TB, K_pad)
    for li in range(num_linear):
        w_ref = wb[2 * li]
        b_ref = wb[2 * li + 1]
        y = jnp.dot(h, w_ref[...], preferred_element_type=jnp.float32)
        y = y + b_ref[...]                             # (1, N) f32 bias broadcast
        if li < num_linear - 1:
            # ReLU (+ dropout == identity in inference); back to bf16 for next MXU pass.
            h = jnp.maximum(y, 0.0).astype(jnp.bfloat16)
        else:
            # Sigmoid: exp on EUP, approximate reciprocal also on EUP (free slot).
            y = jnp.clip(y, -30.0, 30.0)
            out_ref[...] = pl.reciprocal(1.0 + jnp.exp(-y), approx=True)


def custom_model_forward(params, x, num_hidden_layers, batch_tile=128):
    """Run the fused Pallas MLP. x: [B, 2000] f32 -> [B, 94] f32."""
    B, K = x.shape
    layers = [params["fc1"]] + list(params["fcs"]) + [params["out"]]
    num_linear = len(layers)                           # = num_hidden_layers + 2
    out_features = layers[-1][0].shape[1]

    # Lane-friendly padding: K -> mult of 128, output features -> mult of 128,
    # batch -> mult of the batch tile (tile itself a multiple of 8).
    K_pad = _round_up(K, 128)
    N_out_pad = _round_up(out_features, 128)
    B_pad = _round_up(B, 8)
    TB = min(batch_tile, B_pad)
    B_pad = _round_up(B_pad, TB)

    x_p = jnp.zeros((B_pad, K_pad), jnp.bfloat16).at[:B, :K].set(x.astype(jnp.bfloat16))

    padded_layers = []
    for idx, (w, b) in enumerate(layers):
        kin, nout = w.shape
        kin_p = K_pad if idx == 0 else kin
        nout_p = N_out_pad if idx == num_linear - 1 else nout
        w_p = jnp.zeros((kin_p, nout_p), jnp.bfloat16).at[:kin, :nout].set(
            w.astype(jnp.bfloat16))
        b_p = jnp.zeros((1, nout_p), jnp.float32).at[0, :nout].set(b.astype(jnp.float32))
        padded_layers.append((w_p, b_p))

    in_specs = [pl.BlockSpec((TB, K_pad), lambda i: (i, 0))]
    operands = [x_p]
    for w_p, b_p in padded_layers:
        # Weights/biases: whole-array blocks, same block for every grid step
        # (stay resident in VMEM across batch tiles).
        in_specs.append(pl.BlockSpec(w_p.shape, lambda i: (0, 0)))
        in_specs.append(pl.BlockSpec(b_p.shape, lambda i: (0, 0)))
        operands.append(w_p)
        operands.append(b_p)

    kernel = functools.partial(_fused_mlp_kernel, num_linear=num_linear)
    out_padded = pl.pallas_call(
        kernel,
        out_shape=jax.ShapeDtypeStruct((B_pad, N_out_pad), jnp.float32),
        grid_spec=pltpu.PrefetchScalarGridSpec(
            num_scalar_prefetch=0,
            grid=(B_pad // TB,),
            in_specs=in_specs,
            out_specs=pl.BlockSpec((TB, N_out_pad), lambda i: (i, 0)),
        ),
        compiler_params=pltpu.CompilerParams(
            dimension_semantics=("parallel",),   # batch tiles split across TCs (v7x)
            vmem_limit_bytes=48 << 20,           # keeps headroom on v7x's 64 MiB VMEM
        ),
    )(*operands)

    return out_padded[:B, :out_features]


def init_linear_params(key, fan_in, fan_out):
    """Deterministic init mirroring nn.Linear default (uniform +-1/sqrt(fan_in))."""
    k_w, k_b = jax.random.split(key)
    bound = 1.0 / jnp.sqrt(float(fan_in))
    w = jax.random.uniform(k_w, (fan_in, fan_out), jnp.float32, -bound, bound)
    b = jax.random.uniform(k_b, (fan_out,), jnp.float32, -bound, bound)
    return w, b


def make_custom_model_params(key, num_hidden_nodes_per_layer=128, num_hidden_layers=3,
                             in_features=2000, out_features=94):
    H = num_hidden_nodes_per_layer
    keys = jax.random.split(key, num_hidden_layers + 2)
    params = {}
    params["fc1"] = init_linear_params(keys[0], in_features, H)
    params["fcs"] = [init_linear_params(keys[1 + i], H, H) for i in range(num_hidden_layers)]
    params["out"] = init_linear_params(keys[num_hidden_layers + 1], H, out_features)
    return params


def reference_forward(params, x, num_hidden_layers):
    """Pure-JAX reference matching the kernel's numerics (bf16 weights/activations,
    f32 accumulation) for a tight correctness check."""
    layers = [params["fc1"]] + list(params["fcs"]) + [params["out"]]
    h = x.astype(jnp.bfloat16)
    y = None
    for li, (w, b) in enumerate(layers):
        y = jnp.dot(h, w.astype(jnp.bfloat16),
                    preferred_element_type=jnp.float32) + b.astype(jnp.float32)
        if li < len(layers) - 1:
            h = jnp.maximum(y, 0.0).astype(jnp.bfloat16)
        else:
            y = jax.nn.sigmoid(y)
    return y


if __name__ == "__main__":
    NUM_HIDDEN_NODES = 128   # small stand-in for the default 1024
    NUM_HIDDEN_LAYERS = 3    # small stand-in for the default 5
    IN_FEATURES = 2000       # fixed by the module (fc1 = Linear(2000, H))
    OUT_FEATURES = 94        # fixed by the module
    BATCH = 16

    key = jax.random.PRNGKey(0)
    k_params, k_x = jax.random.split(key)
    params = make_custom_model_params(k_params, NUM_HIDDEN_NODES, NUM_HIDDEN_LAYERS,
                                      IN_FEATURES, OUT_FEATURES)
    x = jax.random.normal(k_x, (BATCH, IN_FEATURES), jnp.float32)

    out = jax.block_until_ready(custom_model_forward(params, x, NUM_HIDDEN_LAYERS))
    ref = jax.block_until_ready(reference_forward(params, x, NUM_HIDDEN_LAYERS))

    assert out.shape == (BATCH, OUT_FEATURES), out.shape
    max_err = float(jnp.max(jnp.abs(out - ref)))
    assert max_err < 2e-2, max_err

    print("KERNEL_OK")
</pallas_src>

<mosaic_0001>
module attributes {stable_mosaic.version = 11 : i64} {
  func.func @_fused_mlp_kernel(%arg0: i32, %arg1: memref<16x2048xbf16, #tpu.memory_space<vmem>>, %arg2: memref<2048x128xbf16, #tpu.memory_space<vmem>>, %arg3: memref<1x128xf32, #tpu.memory_space<vmem>>, %arg4: memref<128x128xbf16, #tpu.memory_space<vmem>>, %arg5: memref<1x128xf32, #tpu.memory_space<vmem>>, %arg6: memref<128x128xbf16, #tpu.memory_space<vmem>>, %arg7: memref<1x128xf32, #tpu.memory_space<vmem>>, %arg8: memref<128x128xbf16, #tpu.memory_space<vmem>>, %arg9: memref<1x128xf32, #tpu.memory_space<vmem>>, %arg10: memref<128x128xbf16, #tpu.memory_space<vmem>>, %arg11: memref<1x128xf32, #tpu.memory_space<vmem>>, %arg12: memref<16x128xf32, #tpu.memory_space<vmem>>) attributes {dimension_semantics = [#tpu.dimension_semantics<parallel>], iteration_bounds = array<i64: 1>, scalar_prefetch = 0 : i64, scratch_operands = 0 : i64, tpu.core_type = #tpu.core_type<tc>, window_params = [{transform_indices = @transform_0, window_bounds = array<i64: 16, 2048>}, {pipeline_mode = #tpu.pipeline_mode<synchronous>, transform_indices = @transform_1, window_bounds = array<i64: 2048, 128>}, {pipeline_mode = #tpu.pipeline_mode<synchronous>, transform_indices = @transform_2, window_bounds = array<i64: 1, 128>}, {pipeline_mode = #tpu.pipeline_mode<synchronous>, transform_indices = @transform_3, window_bounds = array<i64: 128, 128>}, {pipeline_mode = #tpu.pipeline_mode<synchronous>, transform_indices = @transform_4, window_bounds = array<i64: 1, 128>}, {pipeline_mode = #tpu.pipeline_mode<synchronous>, transform_indices = @transform_5, window_bounds = array<i64: 128, 128>}, {pipeline_mode = #tpu.pipeline_mode<synchronous>, transform_indices = @transform_6, window_bounds = array<i64: 1, 128>}, {pipeline_mode = #tpu.pipeline_mode<synchronous>, transform_indices = @transform_7, window_bounds = array<i64: 128, 128>}, {pipeline_mode = #tpu.pipeline_mode<synchronous>, transform_indices = @transform_8, window_bounds = array<i64: 1, 128>}, {pipeline_mode = #tpu.pipeline_mode<synchronous>, transform_indices = @transform_9, window_bounds = array<i64: 128, 128>}, {pipeline_mode = #tpu.pipeline_mode<synchronous>, transform_indices = @transform_10, window_bounds = array<i64: 1, 128>}, {transform_indices = @transform_11, window_bounds = array<i64: 16, 128>}]} {
    %c0 = arith.constant 0 : index
    %c0_0 = arith.constant 0 : index
    %0 = vector.load %arg1[%c0, %c0_0] : memref<16x2048xbf16, #tpu.memory_space<vmem>>, vector<16x2048xbf16>
    %c0_1 = arith.constant 0 : index
    %c0_2 = arith.constant 0 : index
    %1 = vector.load %arg2[%c0_1, %c0_2] : memref<2048x128xbf16, #tpu.memory_space<vmem>>, vector<2048x128xbf16>
    %cst = arith.constant dense<0.000000e+00> : vector<16x128xf32>
    %2 = tpu.matmul %0, %1, %cst {dimension_numbers = #tpu.dot_dimension_numbers<[1], [0], [0], [1], [0, 0, 1, 1], [], []>} : vector<16x2048xbf16>, vector<2048x128xbf16>, vector<16x128xf32> -> vector<16x128xf32>
    %c0_3 = arith.constant 0 : index
    %c0_4 = arith.constant 0 : index
    %3 = vector.load %arg3[%c0_3, %c0_4] : memref<1x128xf32, #tpu.memory_space<vmem>>, vector<1x128xf32>
    %4 = vector.broadcast %3 : vector<1x128xf32> to vector<16x128xf32>
    %5 = arith.addf %2, %4 : vector<16x128xf32>
    %cst_5 = arith.constant 0.000000e+00 : f32
    %6 = vector.broadcast %cst_5 : f32 to vector<16x128xf32>
    %7 = arith.maximumf %5, %6 : vector<16x128xf32>
    %8 = arith.truncf %7 : vector<16x128xf32> to vector<16x128xbf16>
    %c0_6 = arith.constant 0 : index
    %c0_7 = arith.constant 0 : index
    %9 = vector.load %arg4[%c0_6, %c0_7] : memref<128x128xbf16, #tpu.memory_space<vmem>>, vector<128x128xbf16>
    %cst_8 = arith.constant dense<0.000000e+00> : vector<16x128xf32>
    %10 = tpu.matmul %8, %9, %cst_8 {dimension_numbers = #tpu.dot_dimension_numbers<[1], [0], [0], [1], [0, 0, 1, 1], [], []>} : vector<16x128xbf16>, vector<128x128xbf16>, vector<16x128xf32> -> vector<16x128xf32>
    %c0_9 = arith.constant 0 : index
    %c0_10 = arith.constant 0 : index
    %11 = vector.load %arg5[%c0_9, %c0_10] : memref<1x128xf32, #tpu.memory_space<vmem>>, vector<1x128xf32>
    %12 = vector.broadcast %11 : vector<1x128xf32> to vector<16x128xf32>
    %13 = arith.addf %10, %12 : vector<16x128xf32>
    %cst_11 = arith.constant 0.000000e+00 : f32
    %14 = vector.broadcast %cst_11 : f32 to vector<16x128xf32>
    %15 = arith.maximumf %13, %14 : vector<16x128xf32>
    %16 = arith.truncf %15 : vector<16x128xf32> to vector<16x128xbf16>
    %c0_12 = arith.constant 0 : index
    %c0_13 = arith.constant 0 : index
    %17 = vector.load %arg6[%c0_12, %c0_13] : memref<128x128xbf16, #tpu.memory_space<vmem>>, vector<128x128xbf16>
    %cst_14 = arith.constant dense<0.000000e+00> : vector<16x128xf32>
    %18 = tpu.matmul %16, %17, %cst_14 {dimension_numbers = #tpu.dot_dimension_numbers<[1], [0], [0], [1], [0, 0, 1, 1], [], []>} : vector<16x128xbf16>, vector<128x128xbf16>, vector<16x128xf32> -> vector<16x128xf32>
    %c0_15 = arith.constant 0 : index
    %c0_16 = arith.constant 0 : index
    %19 = vector.load %arg7[%c0_15, %c0_16] : memref<1x128xf32, #tpu.memory_space<vmem>>, vector<1x128xf32>
    %20 = vector.broadcast %19 : vector<1x128xf32> to vector<16x128xf32>
    %21 = arith.addf %18, %20 : vector<16x128xf32>
    %cst_17 = arith.constant 0.000000e+00 : f32
    %22 = vector.broadcast %cst_17 : f32 to vector<16x128xf32>
    %23 = arith.maximumf %21, %22 : vector<16x128xf32>
    %24 = arith.truncf %23 : vector<16x128xf32> to vector<16x128xbf16>
    %c0_18 = arith.constant 0 : index
    %c0_19 = arith.constant 0 : index
    %25 = vector.load %arg8[%c0_18, %c0_19] : memref<128x128xbf16, #tpu.memory_space<vmem>>, vector<128x128xbf16>
    %cst_20 = arith.constant dense<0.000000e+00> : vector<16x128xf32>
    %26 = tpu.matmul %24, %25, %cst_20 {dimension_numbers = #tpu.dot_dimension_numbers<[1], [0], [0], [1], [0, 0, 1, 1], [], []>} : vector<16x128xbf16>, vector<128x128xbf16>, vector<16x128xf32> -> vector<16x128xf32>
    %c0_21 = arith.constant 0 : index
    %c0_22 = arith.constant 0 : index
    %27 = vector.load %arg9[%c0_21, %c0_22] : memref<1x128xf32, #tpu.memory_space<vmem>>, vector<1x128xf32>
    %28 = vector.broadcast %27 : vector<1x128xf32> to vector<16x128xf32>
    %29 = arith.addf %26, %28 : vector<16x128xf32>
    %cst_23 = arith.constant 0.000000e+00 : f32
    %30 = vector.broadcast %cst_23 : f32 to vector<16x128xf32>
    %31 = arith.maximumf %29, %30 : vector<16x128xf32>
    %32 = arith.truncf %31 : vector<16x128xf32> to vector<16x128xbf16>
    %c0_24 = arith.constant 0 : index
    %c0_25 = arith.constant 0 : index
    %33 = vector.load %arg10[%c0_24, %c0_25] : memref<128x128xbf16, #tpu.memory_space<vmem>>, vector<128x128xbf16>
    %cst_26 = arith.constant dense<0.000000e+00> : vector<16x128xf32>
    %34 = tpu.matmul %32, %33, %cst_26 {dimension_numbers = #tpu.dot_dimension_numbers<[1], [0], [0], [1], [0, 0, 1, 1], [], []>} : vector<16x128xbf16>, vector<128x128xbf16>, vector<16x128xf32> -> vector<16x128xf32>
    %c0_27 = arith.constant 0 : index
    %c0_28 = arith.constant 0 : index
    %35 = vector.load %arg11[%c0_27, %c0_28] : memref<1x128xf32, #tpu.memory_space<vmem>>, vector<1x128xf32>
    %36 = vector.broadcast %35 : vector<1x128xf32> to vector<16x128xf32>
    %37 = arith.addf %34, %36 : vector<16x128xf32>
    %cst_29 = arith.constant -3.000000e+01 : f32
    %cst_30 = arith.constant 3.000000e+01 : f32
    %38 = vector.broadcast %cst_29 : f32 to vector<16x128xf32>
    %39 = arith.maximumf %38, %37 : vector<16x128xf32>
    %40 = vector.broadcast %cst_30 : f32 to vector<16x128xf32>
    %41 = arith.minimumf %40, %39 : vector<16x128xf32>
    %cst_31 = arith.constant 0.000000e+00 : f32
    %42 = vector.broadcast %cst_31 : f32 to vector<16x128xf32>
    %43 = arith.subf %42, %41 : vector<16x128xf32>
    %44 = math.exp %43 : vector<16x128xf32>
    %cst_32 = arith.constant 1.000000e+00 : f32
    %45 = vector.broadcast %cst_32 : f32 to vector<16x128xf32>
    %46 = arith.addf %45, %44 : vector<16x128xf32>
    %47 = tpu.reciprocal %46 {approx = true} : vector<16x128xf32> -> vector<16x128xf32>
    %c0_33 = arith.constant 0 : index
    %c0_34 = arith.constant 0 : index
    %48 = vector.load %arg12[%c0_33, %c0_34] : memref<16x128xf32, #tpu.memory_space<vmem>>, vector<16x128xf32>
    tpu.vector_store %arg12[%c0_33, %c0_34], %47 {strides = array<i32>} : memref<16x128xf32, #tpu.memory_space<vmem>>, vector<16x128xf32>,
    return
  }
  func.func @transform_0(%arg0: i32) -> (i32, i32) {
    %c0_i32 = arith.constant 0 : i32
    %c0_i32_0 = arith.constant 0 : i32
    return %arg0, %c0_i32 : i32, i32
  }
  func.func @transform_1(%arg0: i32) -> (i32, i32) {
    %c0_i32 = arith.constant 0 : i32
    %c0_i32_0 = arith.constant 0 : i32
    %c0_i32_1 = arith.constant 0 : i32
    return %c0_i32, %c0_i32_0 : i32, i32
  }
  func.func @transform_2(%arg0: i32) -> (i32, i32) {
    %c0_i32 = arith.constant 0 : i32
    %c0_i32_0 = arith.constant 0 : i32
    %c0_i32_1 = arith.constant 0 : i32
    return %c0_i32, %c0_i32_0 : i32, i32
  }
  func.func @transform_3(%arg0: i32) -> (i32, i32) {
    %c0_i32 = arith.constant 0 : i32
    %c0_i32_0 = arith.constant 0 : i32
    %c0_i32_1 = arith.constant 0 : i32
    return %c0_i32, %c0_i32_0 : i32, i32
  }
  func.func @transform_4(%arg0: i32) -> (i32, i32) {
    %c0_i32 = arith.constant 0 : i32
    %c0_i32_0 = arith.constant 0 : i32
    %c0_i32_1 = arith.constant 0 : i32
    return %c0_i32, %c0_i32_0 : i32, i32
  }
  func.func @transform_5(%arg0: i32) -> (i32, i32) {
    %c0_i32 = arith.constant 0 : i32
    %c0_i32_0 = arith.constant 0 : i32
    %c0_i32_1 = arith.constant 0 : i32
    return %c0_i32, %c0_i32_0 : i32, i32
  }
  func.func @transform_6(%arg0: i32) -> (i32, i32) {
    %c0_i32 = arith.constant 0 : i32
    %c0_i32_0 = arith.constant 0 : i32
    %c0_i32_1 = arith.constant 0 : i32
    return %c0_i32, %c0_i32_0 : i32, i32
  }
  func.func @transform_7(%arg0: i32) -> (i32, i32) {
    %c0_i32 = arith.constant 0 : i32
    %c0_i32_0 = arith.constant 0 : i32
    %c0_i32_1 = arith.constant 0 : i32
    return %c0_i32, %c0_i32_0 : i32, i32
  }
  func.func @transform_8(%arg0: i32) -> (i32, i32) {
    %c0_i32 = arith.constant 0 : i32
    %c0_i32_0 = arith.constant 0 : i32
    %c0_i32_1 = arith.constant 0 : i32
    return %c0_i32, %c0_i32_0 : i32, i32
  }
  func.func @transform_9(%arg0: i32) -> (i32, i32) {
    %c0_i32 = arith.constant 0 : i32
    %c0_i32_0 = arith.constant 0 : i32
    %c0_i32_1 = arith.constant 0 : i32
    return %c0_i32, %c0_i32_0 : i32, i32
  }
  func.func @transform_10(%arg0: i32) -> (i32, i32) {
    %c0_i32 = arith.constant 0 : i32
    %c0_i32_0 = arith.constant 0 : i32
    %c0_i32_1 = arith.constant 0 : i32
    return %c0_i32, %c0_i32_0 : i32, i32
  }
  func.func @transform_11(%arg0: i32) -> (i32, i32) {
    %c0_i32 = arith.constant 0 : i32
    %c0_i32_0 = arith.constant 0 : i32
    return %arg0, %c0_i32 : i32, i32
  }
}

</mosaic_0001>

<llo_original>
// kernel: tpu_custom_call.1
$region0: #{tpu_custom_call.1}
  #allocation0 [shape = 'u32[]', space=smem, size = 0x4, offset = 0x4, fixed_abs, tag = 'smem constant byte address 0x4 - core index']
  #allocation1 [shape = 'u32[144,128]{1,0:T(1,128)}', space=vmem, size = 0x12000, scoped, tag = 'internal scratch']
  %s0 = inlined_call_operand.hbm [shape: bf16[16,2048], index: 0, kind: input, shape index: {}]
  %s1 = inlined_call_operand.hbm [shape: bf16[2048,128], index: 1, kind: input, shape index: {}]
  %s2 = inlined_call_operand.vmem [shape: f32[1,128], index: 2, kind: input, shape index: {}]
  %s3 = inlined_call_operand.hbm [shape: bf16[128,128], index: 3, kind: input, shape index: {}]
  %s4 = inlined_call_operand.vmem [shape: f32[1,128], index: 4, kind: input, shape index: {}]
  %s5 = inlined_call_operand.hbm [shape: bf16[128,128], index: 5, kind: input, shape index: {}]
  %s6 = inlined_call_operand.vmem [shape: f32[1,128], index: 6, kind: input, shape index: {}]
  %s7 = inlined_call_operand.hbm [shape: bf16[128,128], index: 7, kind: input, shape index: {}]
  %s8 = inlined_call_operand.vmem [shape: f32[1,128], index: 8, kind: input, shape index: {}]
  %s9 = inlined_call_operand.hbm [shape: bf16[128,128], index: 9, kind: input, shape index: {}]
  %s10 = inlined_call_operand.vmem [shape: f32[1,128], index: 10, kind: input, shape index: {}]
  %s11 = inlined_call_operand.hbm [shape: f32[16,128], index: 11, kind: output, shape index: {}]
  %s12 = sld [smem:[#allocation0]]
  $region78: #{tpu_custom_call.1} parent=0
    _
  %s14 = ssub.s32 1, %s12
  %s15 = scalar_select 0, %s14, %s12
  $region1: #{tpu_custom_call.1} parent=0
    #allocation2 [shape = 'u8[65536]{0}', space=vmem, size = 0x10000, scoped, tag = 'input window, operand 0, single buffered']
    #allocation3 [shape = 's32[1]{0}', space=sflag, size = 0x4, scoped, tag = 'scoped memory for tpu_custom_call.1']
    #allocation4 [shape = 's32[1]{0}', space=sflag, size = 0x4, scoped, tag = 'scoped memory for tpu_custom_call.1']
    #allocation5 [shape = 'u8[524288]{0}', space=vmem, size = 0x80000, scoped, tag = 'input window, operand 1, single buffered']
    #allocation6 [shape = 's32[1]{0}', space=sflag, size = 0x4, scoped, tag = 'scoped memory for tpu_custom_call.1']
    #allocation7 [shape = 'u8[32768]{0}', space=vmem, size = 0x8000, scoped, tag = 'input window, operand 3, single buffered']
    #allocation8 [shape = 'u8[32768]{0}', space=vmem, size = 0x8000, scoped, tag = 'input window, operand 5, single buffered']
    #allocation9 [shape = 's32[1]{0}', space=sflag, size = 0x4, scoped, tag = 'scoped memory for tpu_custom_call.1']
    #allocation10 [shape = 'u8[32768]{0}', space=vmem, size = 0x8000, scoped, tag = 'input window, operand 7, single buffered']
    #allocation11 [shape = 'u8[32768]{0}', space=vmem, size = 0x8000, scoped, tag = 'input window, operand 9, single buffered']
    #allocation12 [shape = 's32[1]{0}', space=sflag, size = 0x4, scoped, tag = 'scoped memory for tpu_custom_call.1']
    #allocation13 [shape = 'u8[8192]{0}', space=vmem, size = 0x2000, scoped, tag = 'output window, operand 0, single buffered']
    %16 = vsyncpa [#allocation3], 0
    %17 = vsyncpa [#allocation6], 0
    %18 = vsyncpa [#allocation9], 0
    %19 = vsyncpa [#allocation12], 0
    %20 = vsyncpa [#allocation4], 0
    // Predicated region
    $region2: #{tpu_custom_call.1} parent=1 // pred_check
      _
    $region3: #{tpu_custom_call.1} parent=1 // pred_check_branch
      %22 = sbr.rel (0) target = $region5
    $region4: #{tpu_custom_call.1} parent=1 // pred_region
      %s24 = ssub.s32 2048, 2048
      %25 = vsyncadd [#allocation3], %s24
      %s26 = sshll.u32 [#allocation2], 4
      %s27 = int_to_ptr.vmem [resolvable:$true] %s26
      %32 = dma.hbm_to_vmem [thread:$0]  %s0, 2048, %s27, [#allocation3], 1024, 1024, 64
    $region5: #{tpu_custom_call.1} parent=1 // pred_fallthru
      _
    // Predicated region
    $region6: #{tpu_custom_call.1} parent=1 // pred_check
      _
    $region7: #{tpu_custom_call.1} parent=1 // pred_check_branch
      %34 = sbr.rel (0) target = $region9
    $region8: #{tpu_custom_call.1} parent=1 // pred_region
      %s36 = ssub.s32 16384, 16384
      %37 = vsyncadd [#allocation6], %s36
      %s38 = sshll.u32 [#allocation5], 4
      %s39 = int_to_ptr.vmem [resolvable:$true] %s38
      %44 = dma.hbm_to_vmem [thread:$0]  %s1, 16384, %s39, [#allocation6], 64, 64, 4
    $region9: #{tpu_custom_call.1} parent=1 // pred_fallthru
      _
    // Predicated region
    $region10: #{tpu_custom_call.1} parent=1 // pred_check
      _
    $region11: #{tpu_custom_call.1} parent=1 // pred_check_branch
      %46 = sbr.rel (0) target = $region13
    $region12: #{tpu_custom_call.1} parent=1 // pred_region
      _
    $region13: #{tpu_custom_call.1} parent=1 // pred_fallthru
      _
    // Predicated region
    $region14: #{tpu_custom_call.1} parent=1 // pred_check
      _
    $region15: #{tpu_custom_call.1} parent=1 // pred_check_branch
      %48 = sbr.rel (0) target = $region17
    $region16: #{tpu_custom_call.1} parent=1 // pred_region
      %s50 = ssub.s32 1024, 1024
      %51 = vsyncadd [#allocation6], %s50
      %s52 = sshll.u32 [#allocation7], 4
      %s53 = int_to_ptr.vmem [resolvable:$true] %s52
      %58 = dma.hbm_to_vmem [thread:$0]  %s3, 1024, %s53, [#allocation6], 64, 64, 4
    $region17: #{tpu_custom_call.1} parent=1 // pred_fallthru
      _
    // Predicated region
    $region18: #{tpu_custom_call.1} parent=1 // pred_check
      _
    $region19: #{tpu_custom_call.1} parent=1 // pred_check_branch
      %60 = sbr.rel (0) target = $region21
    $region20: #{tpu_custom_call.1} parent=1 // pred_region
      _
    $region21: #{tpu_custom_call.1} parent=1 // pred_fallthru
      _
    // Predicated region
    $region22: #{tpu_custom_call.1} parent=1 // pred_check
      _
    $region23: #{tpu_custom_call.1} parent=1 // pred_check_branch
      %62 = sbr.rel (0) target = $region25
    $region24: #{tpu_custom_call.1} parent=1 // pred_region
      %s64 = ssub.s32 1024, 1024
      %65 = vsyncadd [#allocation9], %s64
      %s66 = sshll.u32 [#allocation8], 4
      %s67 = int_to_ptr.vmem [resolvable:$true] %s66
      %72 = dma.hbm_to_vmem [thread:$0]  %s5, 1024, %s67, [#allocation9], 64, 64, 4
    $region25: #{tpu_custom_call.1} parent=1 // pred_fallthru
      _
    // Predicated region
    $region26: #{tpu_custom_call.1} parent=1 // pred_check
      _
    $region27: #{tpu_custom_call.1} parent=1 // pred_check_branch
      %74 = sbr.rel (0) target = $region29
    $region28: #{tpu_custom_call.1} parent=1 // pred_region
      _
    $region29: #{tpu_custom_call.1} parent=1 // pred_fallthru
      _
    // Predicated region
    $region30: #{tpu_custom_call.1} parent=1 // pred_check
      _
    $region31: #{tpu_custom_call.1} parent=1 // pred_check_branch
      %76 = sbr.rel (0) target = $region33
    $region32: #{tpu_custom_call.1} parent=1 // pred_region
      %s78 = ssub.s32 1024, 1024
      %79 = vsyncadd [#allocation9], %s78
      %s80 = sshll.u32 [#allocation10], 4
      %s81 = int_to_ptr.vmem [resolvable:$true] %s80
      %86 = dma.hbm_to_vmem [thread:$0]  %s7, 1024, %s81, [#allocation9], 64, 64, 4
    $region33: #{tpu_custom_call.1} parent=1 // pred_fallthru
      _
    // Predicated region
    $region34: #{tpu_custom_call.1} parent=1 // pred_check
      _
    $region35: #{tpu_custom_call.1} parent=1 // pred_check_branch
      %88 = sbr.rel (0) target = $region37
    $region36: #{tpu_custom_call.1} parent=1 // pred_region
      _
    $region37: #{tpu_custom_call.1} parent=1 // pred_fallthru
      _
    // Predicated region
    $region38: #{tpu_custom_call.1} parent=1 // pred_check
      _
    $region39: #{tpu_custom_call.1} parent=1 // pred_check_branch
      %90 = sbr.rel (0) target = $region41
    $region40: #{tpu_custom_call.1} parent=1 // pred_region
      %s92 = ssub.s32 1024, 1024
      %93 = vsyncadd [#allocation12], %s92
      %s94 = sshll.u32 [#allocation11], 4
      %s95 = int_to_ptr.vmem [resolvable:$true] %s94
      %100 = dma.hbm_to_vmem [thread:$0]  %s9, 1024, %s95, [#allocation12], 64, 64, 4
    $region41: #{tpu_custom_call.1} parent=1 // pred_fallthru
      _
    // Predicated region
    $region42: #{tpu_custom_call.1} parent=1 // pred_check
      _
    $region43: #{tpu_custom_call.1} parent=1 // pred_check_branch
      %102 = sbr.rel (0) target = $region45
    $region44: #{tpu_custom_call.1} parent=1 // pred_region
      _
    $region45: #{tpu_custom_call.1} parent=1 // pred_fallthru
      _
    // Predicated region
    $region46: #{tpu_custom_call.1} parent=1 // pred_check
      _
    $region47: #{tpu_custom_call.1} parent=1 // pred_check_branch
      %104 = sbr.rel (0) target = $region49
    $region48: #{tpu_custom_call.1} parent=1 // pred_region
      %105 = dma.done [#allocation3], 2048
    $region49: #{tpu_custom_call.1} parent=1 // pred_fallthru
      _
    // Predicated region
    $region50: #{tpu_custom_call.1} parent=1 // pred_check
      _
    $region51: #{tpu_custom_call.1} parent=1 // pred_check_branch
      %107 = sbr.rel (0) target = $region53
    $region52: #{tpu_custom_call.1} parent=1 // pred_region
      %108 = dma.done [#allocation6], 16384
    $region53: #{tpu_custom_call.1} parent=1 // pred_fallthru
      _
    // Predicated region
    $region54: #{tpu_custom_call.1} parent=1 // pred_check
      _
    $region55: #{tpu_custom_call.1} parent=1 // pred_check_branch
      %110 = sbr.rel (0) target = $region57
    $region56: #{tpu_custom_call.1} parent=1 // pred_region
      %111 = dma.done [#allocation6], 1024
    $region57: #{tpu_custom_call.1} parent=1 // pred_fallthru
      _
    // Predicated region
    $region58: #{tpu_custom_call.1} parent=1 // pred_check
      _
    $region59: #{tpu_custom_call.1} parent=1 // pred_check_branch
      %113 = sbr.rel (0) target = $region61
    $region60: #{tpu_custom_call.1} parent=1 // pred_region
      %114 = dma.done [#allocation9], 1024
    $region61: #{tpu_custom_call.1} parent=1 // pred_fallthru
      _
    // Predicated region
    $region62: #{tpu_custom_call.1} parent=1 // pred_check
      _
    $region63: #{tpu_custom_call.1} parent=1 // pred_check_branch
      %116 = sbr.rel (0) target = $region65
    $region64: #{tpu_custom_call.1} parent=1 // pred_region
      %117 = dma.done [#allocation9], 1024
    $region65: #{tpu_custom_call.1} parent=1 // pred_fallthru
      _
    // Predicated region
    $region66: #{tpu_custom_call.1} parent=1 // pred_check
      _
    $region67: #{tpu_custom_call.1} parent=1 // pred_check_branch
      %119 = sbr.rel (0) target = $region69
    $region68: #{tpu_custom_call.1} parent=1 // pred_region
      %120 = dma.done [#allocation12], 1024
    $region69: #{tpu_custom_call.1} parent=1 // pred_fallthru
      _
    %v122 = vld [vmem:[#allocation2] sm:$0xff]
    %v123 = vld [vmem:[#allocation2 + $0x8] sm:$0xff]
    %v124 = vld [vmem:[#allocation2 + $0x10] sm:$0xff]
    %v125 = vld [vmem:[#allocation2 + $0x18] sm:$0xff]
    %v126 = vld [vmem:[#allocation2 + $0x20] sm:$0xff]
    %v127 = vld [vmem:[#allocation2 + $0x28] sm:$0xff]
    %v128 = vld [vmem:[#allocation2 + $0x30] sm:$0xff]
    %v129 = vld [vmem:[#allocation2 + $0x38] sm:$0xff]
    %v130 = vld [vmem:[#allocation2 + $0x40] sm:$0xff]
    %v131 = vld [vmem:[#allocation2 + $0x48] sm:$0xff]
    %v132 = vld [vmem:[#allocation2 + $0x50] sm:$0xff]
    %v133 = vld [vmem:[#allocation2 + $0x58] sm:$0xff]
    %v134 = vld [vmem:[#allocation2 + $0x60] sm:$0xff]
    %v135 = vld [vmem:[#allocation2 + $0x68] sm:$0xff]
    %v136 = vld [vmem:[#allocation2 + $0x70] sm:$0xff]
    %v137 = vld [vmem:[#allocation2 + $0x78] sm:$0xff]
    %v138 = vld [vmem:[#allocation5] sm:$0xf]
    %v139 = vld [vmem:[#allocation5 + $0x4] sm:$0xf]
    %v140 = vld [vmem:[#allocation5 + $0x8] sm:$0xf]
    %v141 = vld [vmem:[#allocation5 + $0xc] sm:$0xf]
    %v142 = vld [vmem:[#allocation5 + $0x10] sm:$0xf]
    %v143 = vld [vmem:[#allocation5 + $0x14] sm:$0xf]
    %v144 = vld [vmem:[#allocation5 + $0x18] sm:$0xf]
    %v145 = vld [vmem:[#allocation5 + $0x1c] sm:$0xf]
    %v146 = vld [vmem:[#allocation5 + $0x20] sm:$0xf]
    %v147 = vld [vmem:[#allocation5 + $0x24] sm:$0xf]
    %v148 = vld [vmem:[#allocation5 + $0x28] sm:$0xf]
    %v149 = vld [vmem:[#allocation5 + $0x2c] sm:$0xf]
    %v150 = vld [vmem:[#allocation5 + $0x30] sm:$0xf]
    %v151 = vld [vmem:[#allocation5 + $0x34] sm:$0xf]
    %v152 = vld [vmem:[#allocation5 + $0x38] sm:$0xf]
    %v153 = vld [vmem:[#allocation5 + $0x3c] sm:$0xf]
    %v154 = vld [vmem:[#allocation5 + $0x40] sm:$0xf]
    %v155 = vld [vmem:[#allocation5 + $0x44] sm:$0xf]
    %v156 = vld [vmem:[#allocation5 + $0x48] sm:$0xf]
    %v157 = vld [vmem:[#allocation5 + $0x4c] sm:$0xf]
    %v158 = vld [vmem:[#allocation5 + $0x50] sm:$0xf]
    %v159 = vld [vmem:[#allocation5 + $0x54] sm:$0xf]
    %v160 = vld [vmem:[#allocation5 + $0x58] sm:$0xf]
    %v161 = vld [vmem:[#allocation5 + $0x5c] sm:$0xf]
    %v162 = vld [vmem:[#allocation5 + $0x60] sm:$0xf]
    %v163 = vld [vmem:[#allocation5 + $0x64] sm:$0xf]
    %v164 = vld [vmem:[#allocation5 + $0x68] sm:$0xf]
    %v165 = vld [vmem:[#allocation5 + $0x6c] sm:$0xf]
    %v166 = vld [vmem:[#allocation5 + $0x70] sm:$0xf]
    %v167 = vld [vmem:[#allocation5 + $0x74] sm:$0xf]
    %v168 = vld [vmem:[#allocation5 + $0x78] sm:$0xf]
    %v169 = vld [vmem:[#allocation5 + $0x7c] sm:$0xf]
    %v170 = vld [vmem:[#allocation5 + $0x80] sm:$0xf]
    %v171 = vld [vmem:[#allocation5 + $0x84] sm:$0xf]
    %v172 = vld [vmem:[#allocation5 + $0x88] sm:$0xf]
    %v173 = vld [vmem:[#allocation5 + $0x8c] sm:$0xf]
    %v174 = vld [vmem:[#allocation5 + $0x90] sm:$0xf]
    %v175 = vld [vmem:[#allocation5 + $0x94] sm:$0xf]
    %v176 = vld [vmem:[#allocation5 + $0x98] sm:$0xf]
    %v177 = vld [vmem:[#allocation5 + $0x9c] sm:$0xf]
    %v178 = vld [vmem:[#allocation5 + $0xa0] sm:$0xf]
    %v179 = vld [vmem:[#allocation5 + $0xa4] sm:$0xf]
    %v180 = vld [vmem:[#allocation5 + $0xa8] sm:$0xf]
    %v181 = vld [vmem:[#allocation5 + $0xac] sm:$0xf]
    %v182 = vld [vmem:[#allocation5 + $0xb0] sm:$0xf]
    %v183 = vld [vmem:[#allocation5 + $0xb4] sm:$0xf]
    %v184 = vld [vmem:[#allocation5 + $0xb8] sm:$0xf]
    %v185 = vld [vmem:[#allocation5 + $0xbc] sm:$0xf]
    %v186 = vld [vmem:[#allocation5 + $0xc0] sm:$0xf]
    %v187 = vld [vmem:[#allocation5 + $0xc4] sm:$0xf]
    %v188 = vld [vmem:[#allocation5 + $0xc8] sm:$0xf]
    %v189 = vld [vmem:[#allocation5 + $0xcc] sm:$0xf]
    %v190 = vld [vmem:[#allocation5 + $0xd0] sm:$0xf]
    %v191 = vld [vmem:[#allocation5 + $0xd4] sm:$0xf]
    %v192 = vld [vmem:[#allocation5 + $0xd8] sm:$0xf]
    %v193 = vld [vmem:[#allocation5 + $0xdc] sm:$0xf]
    %v194 = vld [vmem:[#allocation5 + $0xe0] sm:$0xf]
    %v195 = vld [vmem:[#allocation5 + $0xe4] sm:$0xf]
    %v196 = vld [vmem:[#allocation5 + $0xe8] sm:$0xf]
    %v197 = vld [vmem:[#allocation5 + $0xec] sm:$0xf]
    %v198 = vld [vmem:[#allocation5 + $0xf0] sm:$0xf]
    %v199 = vld [vmem:[#allocation5 + $0xf4] sm:$0xf]
    %v200 = vld [vmem:[#allocation5 + $0xf8] sm:$0xf]
    %v201 = vld [vmem:[#allocation5 + $0xfc] sm:$0xf]
    %v202 = vld [vmem:[#allocation5 + $0x100] sm:$0xf]
    %v203 = vld [vmem:[#allocation5 + $0x104] sm:$0xf]
    %v204 = vld [vmem:[#allocation5 + $0x108] sm:$0xf]
    %v205 = vld [vmem:[#allocation5 + $0x10c] sm:$0xf]
    %v206 = vld [vmem:[#allocation5 + $0x110] sm:$0xf]
    %v207 = vld [vmem:[#allocation5 + $0x114] sm:$0xf]
    %v208 = vld [vmem:[#allocation5 + $0x118] sm:$0xf]
    %v209 = vld [vmem:[#allocation5 + $0x11c] sm:$0xf]
    %v210 = vld [vmem:[#allocation5 + $0x120] sm:$0xf]
    %v211 = vld [vmem:[#allocation5 + $0x124] sm:$0xf]
    %v212 = vld [vmem:[#allocation5 + $0x128] sm:$0xf]
    %v213 = vld [vmem:[#allocation5 + $0x12c] sm:$0xf]
    %v214 = vld [vmem:[#allocation5 + $0x130] sm:$0xf]
    %v215 = vld [vmem:[#allocation5 + $0x134] sm:$0xf]
    %v216 = vld [vmem:[#allocation5 + $0x138] sm:$0xf]
    %v217 = vld [vmem:[#allocation5 + $0x13c] sm:$0xf]
    %v218 = vld [vmem:[#allocation5 + $0x140] sm:$0xf]
    %v219 = vld [vmem:[#allocation5 + $0x144] sm:$0xf]
    %v220 = vld [vmem:[#allocation5 + $0x148] sm:$0xf]
    %v221 = vld [vmem:[#allocation5 + $0x14c] sm:$0xf]
    %v222 = vld [vmem:[#allocation5 + $0x150] sm:$0xf]
    %v223 = vld [vmem:[#allocation5 + $0x154] sm:$0xf]
    %v224 = vld [vmem:[#allocation5 + $0x158] sm:$0xf]
    %v225 = vld [vmem:[#allocation5 + $0x15c] sm:$0xf]
    %v226 = vld [vmem:[#allocation5 + $0x160] sm:$0xf]
    %v227 = vld [vmem:[#allocation5 + $0x164] sm:$0xf]
    %v228 = vld [vmem:[#allocation5 + $0x168] sm:$0xf]
    %v229 = vld [vmem:[#allocation5 + $0x16c] sm:$0xf]
    %v230 = vld [vmem:[#allocation5 + $0x170] sm:$0xf]
    %v231 = vld [vmem:[#allocation5 + $0x174] sm:$0xf]
    %v232 = vld [vmem:[#allocation5 + $0x178] sm:$0xf]
    %v233 = vld [vmem:[#allocation5 + $0x17c] sm:$0xf]
    %v234 = vld [vmem:[#allocation5 + $0x180] sm:$0xf]
    %v235 = vld [vmem:[#allocation5 + $0x184] sm:$0xf]
    %v236 = vld [vmem:[#allocation5 + $0x188] sm:$0xf]
    %v237 = vld [vmem:[#allocation5 + $0x18c] sm:$0xf]
    %v238 = vld [vmem:[#allocation5 + $0x190] sm:$0xf]
    %v239 = vld [vmem:[#allocation5 + $0x194] sm:$0xf]
    %v240 = vld [vmem:[#allocation5 + $0x198] sm:$0xf]
    %v241 = vld [vmem:[#allocation5 + $0x19c] sm:$0xf]
    %v242 = vld [vmem:[#allocation5 + $0x1a0] sm:$0xf]
    %v243 = vld [vmem:[#allocation5 + $0x1a4] sm:$0xf]
    %v244 = vld [vmem:[#allocation5 + $0x1a8] sm:$0xf]
    %v245 = vld [vmem:[#allocation5 + $0x1ac] sm:$0xf]
    %v246 = vld [vmem:[#allocation5 + $0x1b0] sm:$0xf]
    %v247 = vld [vmem:[#allocation5 + $0x1b4] sm:$0xf]
    %v248 = vld [vmem:[#allocation5 + $0x1b8] sm:$0xf]
    %v249 = vld [vmem:[#allocation5 + $0x1bc] sm:$0xf]
    %v250 = vld [vmem:[#allocation5 + $0x1c0] sm:$0xf]
    %v251 = vld [vmem:[#allocation5 + $0x1c4] sm:$0xf]
    %v252 = vld [vmem:[#allocation5 + $0x1c8] sm:$0xf]
    %v253 = vld [vmem:[#allocation5 + $0x1cc] sm:$0xf]
    %v254 = vld [vmem:[#allocation5 + $0x1d0] sm:$0xf]
    %v255 = vld [vmem:[#allocation5 + $0x1d4] sm:$0xf]
    %v256 = vld [vmem:[#allocation5 + $0x1d8] sm:$0xf]
    %v257 = vld [vmem:[#allocation5 + $0x1dc] sm:$0xf]
    %v258 = vld [vmem:[#allocation5 + $0x1e0] sm:$0xf]
    %v259 = vld [vmem:[#allocation5 + $0x1e4] sm:$0xf]
    %v260 = vld [vmem:[#allocation5 + $0x1e8] sm:$0xf]
    %v261 = vld [vmem:[#allocation5 + $0x1ec] sm:$0xf]
    %v262 = vld [vmem:[#allocation5 + $0x1f0] sm:$0xf]
    %v263 = vld [vmem:[#allocation5 + $0x1f4] sm:$0xf]
    %v264 = vld [vmem:[#allocation5 + $0x1f8] sm:$0xf]
    %v265 = vld [vmem:[#allocation5 + $0x1fc] sm:$0xf]
    %v266 = vld [vmem:[#allocation5 + $0x200] sm:$0xf]
    %v267 = vld [vmem:[#allocation5 + $0x204] sm:$0xf]
    %v268 = vld [vmem:[#allocation5 + $0x208] sm:$0xf]
    %v269 = vld [vmem:[#allocation5 + $0x20c] sm:$0xf]
    %v270 = vld [vmem:[#allocation5 + $0x210] sm:$0xf]
    %v271 = vld [vmem:[#allocation5 + $0x214] sm:$0xf]
    %v272 = vld [vmem:[#allocation5 + $0x218] sm:$0xf]
    %v273 = vld [vmem:[#allocation5 + $0x21c] sm:$0xf]
    %v274 = vld [vmem:[#allocation5 + $0x220] sm:$0xf]
    %v275 = vld [vmem:[#allocation5 + $0x224] sm:$0xf]
    %v276 = vld [vmem:[#allocation5 + $0x228] sm:$0xf]
    %v277 = vld [vmem:[#allocation5 + $0x22c] sm:$0xf]
    %v278 = vld [vmem:[#allocation5 + $0x230] sm:$0xf]
    %v279 = vld [vmem:[#allocation5 + $0x234] sm:$0xf]
    %v280 = vld [vmem:[#allocation5 + $0x238] sm:$0xf]
    %v281 = vld [vmem:[#allocation5 + $0x23c] sm:$0xf]
    %v282 = vld [vmem:[#allocation5 + $0x240] sm:$0xf]
    %v283 = vld [vmem:[#allocation5 + $0x244] sm:$0xf]
    %v284 = vld [vmem:[#allocation5 + $0x248] sm:$0xf]
    %v285 = vld [vmem:[#allocation5 + $0x24c] sm:$0xf]
    %v286 = vld [vmem:[#allocation5 + $0x250] sm:$0xf]
    %v287 = vld [vmem:[#allocation5 + $0x254] sm:$0xf]
    %v288 = vld [vmem:[#allocation5 + $0x258] sm:$0xf]
    %v289 = vld [vmem:[#allocation5 + $0x25c] sm:$0xf]
    %v290 = vld [vmem:[#allocation5 + $0x260] sm:$0xf]
    %v291 = vld [vmem:[#allocation5 + $0x264] sm:$0xf]
    %v292 = vld [vmem:[#allocation5 + $0x268] sm:$0xf]
    %v293 = vld [vmem:[#allocation5 + $0x26c] sm:$0xf]
    %v294 = vld [vmem:[#allocation5 + $0x270] sm:$0xf]
    %v295 = vld [vmem:[#allocation5 + $0x274] sm:$0xf]
    %v296 = vld [vmem:[#allocation5 + $0x278] sm:$0xf]
    %v297 = vld [vmem:[#allocation5 + $0x27c] sm:$0xf]
    %v298 = vld [vmem:[#allocation5 + $0x280] sm:$0xf]
    %v299 = vld [vmem:[#allocation5 + $0x284] sm:$0xf]
    %v300 = vld [vmem:[#allocation5 + $0x288] sm:$0xf]
    %v301 = vld [vmem:[#allocation5 + $0x28c] sm:$0xf]
    %v302 = vld [vmem:[#allocation5 + $0x290] sm:$0xf]
    %v303 = vld [vmem:[#allocation5 + $0x294] sm:$0xf]
    %v304 = vld [vmem:[#allocation5 + $0x298] sm:$0xf]
    %v305 = vld [vmem:[#allocation5 + $0x29c] sm:$0xf]
    %v306 = vld [vmem:[#allocation5 + $0x2a0] sm:$0xf]
    %v307 = vld [vmem:[#allocation5 + $0x2a4] sm:$0xf]
    %v308 = vld [vmem:[#allocation5 + $0x2a8] sm:$0xf]
    %v309 = vld [vmem:[#allocation5 + $0x2ac] sm:$0xf]
    %v310 = vld [vmem:[#allocation5 + $0x2b0] sm:$0xf]
    %v311 = vld [vmem:[#allocation5 + $0x2b4] sm:$0xf]
    %v312 = vld [vmem:[#allocation5 + $0x2b8] sm:$0xf]
    %v313 = vld [vmem:[#allocation5 + $0x2bc] sm:$0xf]
    %v314 = vld [vmem:[#allocation5 + $0x2c0] sm:$0xf]
    %v315 = vld [vmem:[#allocation5 + $0x2c4] sm:$0xf]
    %v316 = vld [vmem:[#allocation5 + $0x2c8] sm:$0xf]
    %v317 = vld [vmem:[#allocation5 + $0x2cc] sm:$0xf]
    %v318 = vld [vmem:[#allocation5 + $0x2d0] sm:$0xf]
    %v319 = vld [vmem:[#allocation5 + $0x2d4] sm:$0xf]
    %v320 = vld [vmem:[#allocation5 + $0x2d8] sm:$0xf]
    %v321 = vld [vmem:[#allocation5 + $0x2dc] sm:$0xf]
    %v322 = vld [vmem:[#allocation5 + $0x2e0] sm:$0xf]
    %v323 = vld [vmem:[#allocation5 + $0x2e4] sm:$0xf]
    %v324 = vld [vmem:[#allocation5 + $0x2e8] sm:$0xf]
    %v325 = vld [vmem:[#allocation5 + $0x2ec] sm:$0xf]
    %v326 = vld [vmem:[#allocation5 + $0x2f0] sm:$0xf]
    %v327 = vld [vmem:[#allocation5 + $0x2f4] sm:$0xf]
    %v328 = vld [vmem:[#allocation5 + $0x2f8] sm:$0xf]
    %v329 = vld [vmem:[#allocation5 + $0x2fc] sm:$0xf]
    %v330 = vld [vmem:[#allocation5 + $0x300] sm:$0xf]
    %v331 = vld [vmem:[#allocation5 + $0x304] sm:$0xf]
    %v332 = vld [vmem:[#allocation5 + $0x308] sm:$0xf]
    %v333 = vld [vmem:[#allocation5 + $0x30c] sm:$0xf]
    %v334 = vld [vmem:[#allocation5 + $0x310] sm:$0xf]
    %v335 = vld [vmem:[#allocation5 + $0x314] sm:$0xf]
    %v336 = vld [vmem:[#allocation5 + $0x318] sm:$0xf]
    %v337 = vld [vmem:[#allocation5 + $0x31c] sm:$0xf]
    %v338 = vld [vmem:[#allocation5 + $0x320] sm:$0xf]
    %v339 = vld [vmem:[#allocation5 + $0x324] sm:$0xf]
    %v340 = vld [vmem:[#allocation5 + $0x328] sm:$0xf]
    %v341 = vld [vmem:[#allocation5 + $0x32c] sm:$0xf]
    %v342 = vld [vmem:[#allocation5 + $0x330] sm:$0xf]
    %v343 = vld [vmem:[#allocation5 + $0x334] sm:$0xf]
    %v344 = vld [vmem:[#allocation5 + $0x338] sm:$0xf]
    %v345 = vld [vmem:[#allocation5 + $0x33c] sm:$0xf]
    %v346 = vld [vmem:[#allocation5 + $0x340] sm:$0xf]
    %v347 = vld [vmem:[#allocation5 + $0x344] sm:$0xf]
    %v348 = vld [vmem:[#allocation5 + $0x348] sm:$0xf]
    %v349 = vld [vmem:[#allocation5 + $0x34c] sm:$0xf]
    %v350 = vld [vmem:[#allocation5 + $0x350] sm:$0xf]
    %v351 = vld [vmem:[#allocation5 + $0x354] sm:$0xf]
    %v352 = vld [vmem:[#allocation5 + $0x358] sm:$0xf]
    %v353 = vld [vmem:[#allocation5 + $0x35c] sm:$0xf]
    %v354 = vld [vmem:[#allocation5 + $0x360] sm:$0xf]
    %v355 = vld [vmem:[#allocation5 + $0x364] sm:$0xf]
    %v356 = vld [vmem:[#allocation5 + $0x368] sm:$0xf]
    %v357 = vld [vmem:[#allocation5 + $0x36c] sm:$0xf]
    %v358 = vld [vmem:[#allocation5 + $0x370] sm:$0xf]
    %v359 = vld [vmem:[#allocation5 + $0x374] sm:$0xf]
    %v360 = vld [vmem:[#allocation5 + $0x378] sm:$0xf]
    %v361 = vld [vmem:[#allocation5 + $0x37c] sm:$0xf]
    %v362 = vld [vmem:[#allocation5 + $0x380] sm:$0xf]
    %v363 = vld [vmem:[#allocation5 + $0x384] sm:$0xf]
    %v364 = vld [vmem:[#allocation5 + $0x388] sm:$0xf]
    %v365 = vld [vmem:[#allocation5 + $0x38c] sm:$0xf]
    %v366 = vld [vmem:[#allocation5 + $0x390] sm:$0xf]
    %v367 = vld [vmem:[#allocation5 + $0x394] sm:$0xf]
    %v368 = vld [vmem:[#allocation5 + $0x398] sm:$0xf]
    %v369 = vld [vmem:[#allocation5 + $0x39c] sm:$0xf]
    %v370 = vld [vmem:[#allocation5 + $0x3a0] sm:$0xf]
    %v371 = vld [vmem:[#allocation5 + $0x3a4] sm:$0xf]
    %v372 = vld [vmem:[#allocation5 + $0x3a8] sm:$0xf]
    %v373 = vld [vmem:[#allocation5 + $0x3ac] sm:$0xf]
    %v374 = vld [vmem:[#allocation5 + $0x3b0] sm:$0xf]
    %v375 = vld [vmem:[#allocation5 + $0x3b4] sm:$0xf]
    %v376 = vld [vmem:[#allocation5 + $0x3b8] sm:$0xf]
    %v377 = vld [vmem:[#allocation5 + $0x3bc] sm:$0xf]
    %v378 = vld [vmem:[#allocation5 + $0x3c0] sm:$0xf]
    %v379 = vld [vmem:[#allocation5 + $0x3c4] sm:$0xf]
    %v380 = vld [vmem:[#allocation5 + $0x3c8] sm:$0xf]
    %v381 = vld [vmem:[#allocation5 + $0x3cc] sm:$0xf]
    %v382 = vld [vmem:[#allocation5 + $0x3d0] sm:$0xf]
    %v383 = vld [vmem:[#allocation5 + $0x3d4] sm:$0xf]
    %v384 = vld [vmem:[#allocation5 + $0x3d8] sm:$0xf]
    %v385 = vld [vmem:[#allocation5 + $0x3dc] sm:$0xf]
    %v386 = vld [vmem:[#allocation5 + $0x3e0] sm:$0xf]
    %v387 = vld [vmem:[#allocation5 + $0x3e4] sm:$0xf]
    %v388 = vld [vmem:[#allocation5 + $0x3e8] sm:$0xf]
    %v389 = vld [vmem:[#allocation5 + $0x3ec] sm:$0xf]
    %v390 = vld [vmem:[#allocation5 + $0x3f0] sm:$0xf]
    %v391 = vld [vmem:[#allocation5 + $0x3f4] sm:$0xf]
    %v392 = vld [vmem:[#allocation5 + $0x3f8] sm:$0xf]
    %v393 = vld [vmem:[#allocation5 + $0x3fc] sm:$0xf]
    %v394 = vld [vmem:[%s2] sm:$0x1]
    %v396 = vlaneseq
    %v397 = vshrl.u32 %v396, 7
    %v398 = vsub.s32 0, %v397
    %v399 = vrot.slane %v394, %v398
    %v417 = vunpack.c.l.b16 %v122
    %v418 = vunpack.c.h.b16 %v122
    %v419 = vunpack.c.l.b16 %v123
    %v420 = vunpack.c.h.b16 %v123
    %v421 = vunpack.c.l.b16 %v124
    %v422 = vunpack.c.h.b16 %v124
    %v423 = vunpack.c.l.b16 %v125
    %v424 = vunpack.c.h.b16 %v125
    %v425 = vunpack.c.l.b16 %v126
    %v426 = vunpack.c.h.b16 %v126
    %v427 = vunpack.c.l.b16 %v127
    %v428 = vunpack.c.h.b16 %v127
    %v429 = vunpack.c.l.b16 %v128
    %v430 = vunpack.c.h.b16 %v128
    %v431 = vunpack.c.l.b16 %v129
    %v432 = vunpack.c.h.b16 %v129
    %v433 = vunpack.c.l.b16 %v130
    %v434 = vunpack.c.h.b16 %v130
    %v435 = vunpack.c.l.b16 %v131
    %v436 = vunpack.c.h.b16 %v131
    %v437 = vunpack.c.l.b16 %v132
    %v438 = vunpack.c.h.b16 %v132
    %v439 = vunpack.c.l.b16 %v133
    %v440 = vunpack.c.h.b16 %v133
    %v441 = vunpack.c.l.b16 %v134
    %v442 = vunpack.c.h.b16 %v134
    %v443 = vunpack.c.l.b16 %v135
    %v444 = vunpack.c.h.b16 %v135
    %v445 = vunpack.c.l.b16 %v136
    %v446 = vunpack.c.h.b16 %v136
    %v447 = vunpack.c.l.b16 %v137
    %v448 = vunpack.c.h.b16 %v137
    %v449 = vpack.c.b16 %v433, %v417
    %v450 = vpack.c.b16 %v434, %v418
    %v451 = vpack.c.b16 %v435, %v419
    %v452 = vpack.c.b16 %v436, %v420
    %v453 = vpack.c.b16 %v437, %v421
    %v454 = vpack.c.b16 %v438, %v422
    %v455 = vpack.c.b16 %v439, %v423
    %v456 = vpack.c.b16 %v440, %v424
    %v457 = vpack.c.b16 %v441, %v425
    %v458 = vpack.c.b16 %v442, %v426
    %v459 = vpack.c.b16 %v443, %v427
    %v460 = vpack.c.b16 %v444, %v428
    %v461 = vpack.c.b16 %v445, %v429
    %v462 = vpack.c.b16 %v446, %v430
    %v463 = vpack.c.b16 %v447, %v431
    %v464 = vpack.c.b16 %v448, %v432
    %v737 = vunpack.c.l.b16 %v138
    %v738 = vunpack.c.l.b16 %v139
    %v739 = vunpack.c.l.b16 %v140
    %v740 = vunpack.c.l.b16 %v141
    %v741 = vunpack.c.l.b16 %v142
    %v742 = vunpack.c.l.b16 %v143
    %v743 = vunpack.c.l.b16 %v144
    %v744 = vunpack.c.l.b16 %v145
    %v745 = vunpack.c.l.b16 %v146
    %v746 = vunpack.c.l.b16 %v147
    %v747 = vunpack.c.l.b16 %v148
    %v748 = vunpack.c.l.b16 %v149
    %v749 = vunpack.c.l.b16 %v150
    %v750 = vunpack.c.l.b16 %v151
    %v751 = vunpack.c.l.b16 %v152
    %v752 = vunpack.c.l.b16 %v153
    %v753 = vunpack.c.l.b16 %v154
    %v754 = vunpack.c.l.b16 %v155
    %v755 = vunpack.c.l.b16 %v156
    %v756 = vunpack.c.l.b16 %v157
    %v757 = vunpack.c.l.b16 %v158
    %v758 = vunpack.c.l.b16 %v159
    %v759 = vunpack.c.l.b16 %v160
    %v760 = vunpack.c.l.b16 %v161
    %v761 = vunpack.c.l.b16 %v162
    %v762 = vunpack.c.l.b16 %v163
    %v763 = vunpack.c.l.b16 %v164
    %v764 = vunpack.c.l.b16 %v165
    %v765 = vunpack.c.l.b16 %v166
    %v766 = vunpack.c.l.b16 %v167
    %v767 = vunpack.c.l.b16 %v168
    %v768 = vunpack.c.l.b16 %v169
    %v769 = vunpack.c.l.b16 %v170
    %v770 = vunpack.c.l.b16 %v171
    %v771 = vunpack.c.l.b16 %v172
    %v772 = vunpack.c.l.b16 %v173
    %v773 = vunpack.c.l.b16 %v174
    %v774 = vunpack.c.l.b16 %v175
    %v775 = vunpack.c.l.b16 %v176
    %v776 = vunpack.c.l.b16 %v177
    %v777 = vunpack.c.l.b16 %v178
    %v778 = vunpack.c.l.b16 %v179
    %v779 = vunpack.c.l.b16 %v180
    %v780 = vunpack.c.l.b16 %v181
    %v781 = vunpack.c.l.b16 %v182
    %v782 = vunpack.c.l.b16 %v183
    %v783 = vunpack.c.l.b16 %v184
    %v784 = vunpack.c.l.b16 %v185
    %v785 = vunpack.c.l.b16 %v186
    %v786 = vunpack.c.l.b16 %v187
    %v787 = vunpack.c.l.b16 %v188
    %v788 = vunpack.c.l.b16 %v189
    %v789 = vunpack.c.l.b16 %v190
    %v790 = vunpack.c.l.b16 %v191
    %v791 = vunpack.c.l.b16 %v192
    %v792 = vunpack.c.l.b16 %v193
    %v793 = vunpack.c.l.b16 %v194
    %v794 = vunpack.c.l.b16 %v195
    %v795 = vunpack.c.l.b16 %v196
    %v796 = vunpack.c.l.b16 %v197
    %v797 = vunpack.c.l.b16 %v198
    %v798 = vunpack.c.l.b16 %v199
    %v799 = vunpack.c.l.b16 %v200
    %v800 = vunpack.c.l.b16 %v201
    %v801 = vunpack.c.l.b16 %v202
    %v802 = vunpack.c.l.b16 %v203
    %v803 = vunpack.c.l.b16 %v204
    %v804 = vunpack.c.l.b16 %v205
    %v805 = vunpack.c.l.b16 %v206
    %v806 = vunpack.c.l.b16 %v207
    %v807 = vunpack.c.l.b16 %v208
    %v808 = vunpack.c.l.b16 %v209
    %v809 = vunpack.c.l.b16 %v210
    %v810 = vunpack.c.l.b16 %v211
    %v811 = vunpack.c.l.b16 %v212
    %v812 = vunpack.c.l.b16 %v213
    %v813 = vunpack.c.l.b16 %v214
    %v814 = vunpack.c.l.b16 %v215
    %v815 = vunpack.c.l.b16 %v216
    %v816 = vunpack.c.l.b16 %v217
    %v817 = vunpack.c.l.b16 %v218
    %v818 = vunpack.c.l.b16 %v219
    %v819 = vunpack.c.l.b16 %v220
    %v820 = vunpack.c.l.b16 %v221
    %v821 = vunpack.c.l.b16 %v222
    %v822 = vunpack.c.l.b16 %v223
    %v823 = vunpack.c.l.b16 %v224
    %v824 = vunpack.c.l.b16 %v225
    %v825 = vunpack.c.l.b16 %v226
    %v826 = vunpack.c.l.b16 %v227
    %v827 = vunpack.c.l.b16 %v228
    %v828 = vunpack.c.l.b16 %v229
    %v829 = vunpack.c.l.b16 %v230
    %v830 = vunpack.c.l.b16 %v231
    %v831 = vunpack.c.l.b16 %v232
    %v832 = vunpack.c.l.b16 %v233
    %v833 = vunpack.c.l.b16 %v234
    %v834 = vunpack.c.l.b16 %v235
    %v835 = vunpack.c.l.b16 %v236
    %v836 = vunpack.c.l.b16 %v237
    %v837 = vunpack.c.l.b16 %v238
    %v838 = vunpack.c.l.b16 %v239
    %v839 = vunpack.c.l.b16 %v240
    %v840 = vunpack.c.l.b16 %v241
    %v841 = vunpack.c.l.b16 %v242
    %v842 = vunpack.c.l.b16 %v243
    %v843 = vunpack.c.l.b16 %v244
    %v844 = vunpack.c.l.b16 %v245
    %v845 = vunpack.c.l.b16 %v246
    %v846 = vunpack.c.l.b16 %v247
    %v847 = vunpack.c.l.b16 %v248
    %v848 = vunpack.c.l.b16 %v249
    %v849 = vunpack.c.l.b16 %v250
    %v850 = vunpack.c.l.b16 %v251
    %v851 = vunpack.c.l.b16 %v252
    %v852 = vunpack.c.l.b16 %v253
    %v853 = vunpack.c.l.b16 %v254
    %v854 = vunpack.c.l.b16 %v255
    %v855 = vunpack.c.l.b16 %v256
    %v856 = vunpack.c.l.b16 %v257
    %v857 = vunpack.c.l.b16 %v258
    %v858 = vunpack.c.l.b16 %v259
    %v859 = vunpack.c.l.b16 %v260
    %v860 = vunpack.c.l.b16 %v261
    %v861 = vunpack.c.l.b16 %v262
    %v862 = vunpack.c.l.b16 %v263
    %v863 = vunpack.c.l.b16 %v264
    %v864 = vunpack.c.l.b16 %v265
    %v865 = vunpack.c.l.b16 %v266
    %v866 = vunpack.c.l.b16 %v267
    %v867 = vunpack.c.l.b16 %v268
    %v868 = vunpack.c.l.b16 %v269
    %v869 = vunpack.c.l.b16 %v270
    %v870 = vunpack.c.l.b16 %v271
    %v871 = vunpack.c.l.b16 %v272
    %v872 = vunpack.c.l.b16 %v273
    %v873 = vunpack.c.l.b16 %v274
    %v874 = vunpack.c.l.b16 %v275
    %v875 = vunpack.c.l.b16 %v276
    %v876 = vunpack.c.l.b16 %v277
    %v877 = vunpack.c.l.b16 %v278
    %v878 = vunpack.c.l.b16 %v279
    %v879 = vunpack.c.l.b16 %v280
    %v880 = vunpack.c.l.b16 %v281
    %v881 = vunpack.c.l.b16 %v282
    %v882 = vunpack.c.l.b16 %v283
    %v883 = vunpack.c.l.b16 %v284
    %v884 = vunpack.c.l.b16 %v285
    %v885 = vunpack.c.l.b16 %v286
    %v886 = vunpack.c.l.b16 %v287
    %v887 = vunpack.c.l.b16 %v288
    %v888 = vunpack.c.l.b16 %v289
    %v889 = vunpack.c.l.b16 %v290
    %v890 = vunpack.c.l.b16 %v291
    %v891 = vunpack.c.l.b16 %v292
    %v892 = vunpack.c.l.b16 %v293
    %v893 = vunpack.c.l.b16 %v294
    %v894 = vunpack.c.l.b16 %v295
    %v895 = vunpack.c.l.b16 %v296
    %v896 = vunpack.c.l.b16 %v297
    %v897 = vunpack.c.l.b16 %v298
    %v898 = vunpack.c.l.b16 %v299
    %v899 = vunpack.c.l.b16 %v300
    %v900 = vunpack.c.l.b16 %v301
    %v901 = vunpack.c.l.b16 %v302
    %v902 = vunpack.c.l.b16 %v303
    %v903 = vunpack.c.l.b16 %v304
    %v904 = vunpack.c.l.b16 %v305
    %v905 = vunpack.c.l.b16 %v306
    %v906 = vunpack.c.l.b16 %v307
    %v907 = vunpack.c.l.b16 %v308
    %v908 = vunpack.c.l.b16 %v309
    %v909 = vunpack.c.l.b16 %v310
    %v910 = vunpack.c.l.b16 %v311
    %v911 = vunpack.c.l.b16 %v312
    %v912 = vunpack.c.l.b16 %v313
    %v913 = vunpack.c.l.b16 %v314
    %v914 = vunpack.c.l.b16 %v315
    %v915 = vunpack.c.l.b16 %v316
    %v916 = vunpack.c.l.b16 %v317
    %v917 = vunpack.c.l.b16 %v318
    %v918 = vunpack.c.l.b16 %v319
    %v919 = vunpack.c.l.b16 %v320
    %v920 = vunpack.c.l.b16 %v321
    %v921 = vunpack.c.l.b16 %v322
    %v922 = vunpack.c.l.b16 %v323
    %v923 = vunpack.c.l.b16 %v324
    %v924 = vunpack.c.l.b16 %v325
    %v925 = vunpack.c.l.b16 %v326
    %v926 = vunpack.c.l.b16 %v327
    %v927 = vunpack.c.l.b16 %v328
    %v928 = vunpack.c.l.b16 %v329
    %v929 = vunpack.c.l.b16 %v330
    %v930 = vunpack.c.l.b16 %v331
    %v931 = vunpack.c.l.b16 %v332
    %v932 = vunpack.c.l.b16 %v333
    %v933 = vunpack.c.l.b16 %v334
    %v934 = vunpack.c.l.b16 %v335
    %v935 = vunpack.c.l.b16 %v336
    %v936 = vunpack.c.l.b16 %v337
    %v937 = vunpack.c.l.b16 %v338
    %v938 = vunpack.c.l.b16 %v339
    %v939 = vunpack.c.l.b16 %v340
    %v940 = vunpack.c.l.b16 %v341
    %v941 = vunpack.c.l.b16 %v342
    %v942 = vunpack.c.l.b16 %v343
    %v943 = vunpack.c.l.b16 %v344
    %v944 = vunpack.c.l.b16 %v345
    %v945 = vunpack.c.l.b16 %v346
    %v946 = vunpack.c.l.b16 %v347
    %v947 = vunpack.c.l.b16 %v348
    %v948 = vunpack.c.l.b16 %v349
    %v949 = vunpack.c.l.b16 %v350
    %v950 = vunpack.c.l.b16 %v351
    %v951 = vunpack.c.l.b16 %v352
    %v952 = vunpack.c.l.b16 %v353
    %v953 = vunpack.c.l.b16 %v354
    %v954 = vunpack.c.l.b16 %v355
    %v955 = vunpack.c.l.b16 %v356
    %v956 = vunpack.c.l.b16 %v357
    %v957 = vunpack.c.l.b16 %v358
    %v958 = vunpack.c.l.b16 %v359
    %v959 = vunpack.c.l.b16 %v360
    %v960 = vunpack.c.l.b16 %v361
    %v961 = vunpack.c.l.b16 %v362
    %v962 = vunpack.c.l.b16 %v363
    %v963 = vunpack.c.l.b16 %v364
    %v964 = vunpack.c.l.b16 %v365
    %v965 = vunpack.c.l.b16 %v366
    %v966 = vunpack.c.l.b16 %v367
    %v967 = vunpack.c.l.b16 %v368
    %v968 = vunpack.c.l.b16 %v369
    %v969 = vunpack.c.l.b16 %v370
    %v970 = vunpack.c.l.b16 %v371
    %v971 = vunpack.c.l.b16 %v372
    %v972 = vunpack.c.l.b16 %v373
    %v973 = vunpack.c.l.b16 %v374
    %v974 = vunpack.c.l.b16 %v375
    %v975 = vunpack.c.l.b16 %v376
    %v976 = vunpack.c.l.b16 %v377
    %v977 = vunpack.c.l.b16 %v378
    %v978 = vunpack.c.l.b16 %v379
    %v979 = vunpack.c.l.b16 %v380
    %v980 = vunpack.c.l.b16 %v381
    %v981 = vunpack.c.l.b16 %v382
    %v982 = vunpack.c.l.b16 %v383
    %v983 = vunpack.c.l.b16 %v384
    %v984 = vunpack.c.l.b16 %v385
    %v985 = vunpack.c.l.b16 %v386
    %v986 = vunpack.c.l.b16 %v387
    %v987 = vunpack.c.l.b16 %v388
    %v988 = vunpack.c.l.b16 %v389
    %v989 = vunpack.c.l.b16 %v390
    %v990 = vunpack.c.l.b16 %v391
    %v991 = vunpack.c.l.b16 %v392
    %v992 = vunpack.c.l.b16 %v393
    %v993 = vpack.c.b16 %v738, %v737
    %v994 = vpack.c.b16 %v740, %v739
    %v995 = vpack.c.b16 %v742, %v741
    %v996 = vpack.c.b16 %v744, %v743
    %v997 = vpack.c.b16 %v746, %v745
    %v998 = vpack.c.b16 %v748, %v747
    %v999 = vpack.c.b16 %v750, %v749
    %v1000 = vpack.c.b16 %v752, %v751
    %v1001 = vpack.c.b16 %v754, %v753
    %v1002 = vpack.c.b16 %v756, %v755
    %v1003 = vpack.c.b16 %v758, %v757
    %v1004 = vpack.c.b16 %v760, %v759
    %v1005 = vpack.c.b16 %v762, %v761
    %v1006 = vpack.c.b16 %v764, %v763
    %v1007 = vpack.c.b16 %v766, %v765
    %v1008 = vpack.c.b16 %v768, %v767
    %v1009 = vpack.c.b16 %v770, %v769
    %v1010 = vpack.c.b16 %v772, %v771
    %v1011 = vpack.c.b16 %v774, %v773
    %v1012 = vpack.c.b16 %v776, %v775
    %v1013 = vpack.c.b16 %v778, %v777
    %v1014 = vpack.c.b16 %v780, %v779
    %v1015 = vpack.c.b16 %v782, %v781
    %v1016 = vpack.c.b16 %v784, %v783
    %v1017 = vpack.c.b16 %v786, %v785
    %v1018 = vpack.c.b16 %v788, %v787
    %v1019 = vpack.c.b16 %v790, %v789
    %v1020 = vpack.c.b16 %v792, %v791
    %v1021 = vpack.c.b16 %v794, %v793
    %v1022 = vpack.c.b16 %v796, %v795
    %v1023 = vpack.c.b16 %v798, %v797
    %v1024 = vpack.c.b16 %v800, %v799
    %v1025 = vpack.c.b16 %v802, %v801
    %v1026 = vpack.c.b16 %v804, %v803
    %v1027 = vpack.c.b16 %v806, %v805
    %v1028 = vpack.c.b16 %v808, %v807
    %v1029 = vpack.c.b16 %v810, %v809
    %v1030 = vpack.c.b16 %v812, %v811
    %v1031 = vpack.c.b16 %v814, %v813
    %v1032 = vpack.c.b16 %v816, %v815
    %v1033 = vpack.c.b16 %v818, %v817
    %v1034 = vpack.c.b16 %v820, %v819
    %v1035 = vpack.c.b16 %v822, %v821
    %v1036 = vpack.c.b16 %v824, %v823
    %v1037 = vpack.c.b16 %v826, %v825
    %v1038 = vpack.c.b16 %v828, %v827
    %v1039 = vpack.c.b16 %v830, %v829
    %v1040 = vpack.c.b16 %v832, %v831
    %v1041 = vpack.c.b16 %v834, %v833
    %v1042 = vpack.c.b16 %v836, %v835
    %v1043 = vpack.c.b16 %v838, %v837
    %v1044 = vpack.c.b16 %v840, %v839
    %v1045 = vpack.c.b16 %v842, %v841
    %v1046 = vpack.c.b16 %v844, %v843
    %v1047 = vpack.c.b16 %v846, %v845
    %v1048 = vpack.c.b16 %v848, %v847
    %v1049 = vpack.c.b16 %v850, %v849
    %v1050 = vpack.c.b16 %v852, %v851
    %v1051 = vpack.c.b16 %v854, %v853
    %v1052 = vpack.c.b16 %v856, %v855
    %v1053 = vpack.c.b16 %v858, %v857
    %v1054 = vpack.c.b16 %v860, %v859
    %v1055 = vpack.c.b16 %v862, %v861
    %v1056 = vpack.c.b16 %v864, %v863
    %v1057 = vpack.c.b16 %v866, %v865
    %v1058 = vpack.c.b16 %v868, %v867
    %v1059 = vpack.c.b16 %v870, %v869
    %v1060 = vpack.c.b16 %v872, %v871
    %v1061 = vpack.c.b16 %v874, %v873
    %v1062 = vpack.c.b16 %v876, %v875
    %v1063 = vpack.c.b16 %v878, %v877
    %v1064 = vpack.c.b16 %v880, %v879
    %v1065 = vpack.c.b16 %v882, %v881
    %v1066 = vpack.c.b16 %v884, %v883
    %v1067 = vpack.c.b16 %v886, %v885
    %v1068 = vpack.c.b16 %v888, %v887
    %v1069 = vpack.c.b16 %v890, %v889
    %v1070 = vpack.c.b16 %v892, %v891
    %v1071 = vpack.c.b16 %v894, %v893
    %v1072 = vpack.c.b16 %v896, %v895
    %v1073 = vpack.c.b16 %v898, %v897
    %v1074 = vpack.c.b16 %v900, %v899
    %v1075 = vpack.c.b16 %v902, %v901
    %v1076 = vpack.c.b16 %v904, %v903
    %v1077 = vpack.c.b16 %v906, %v905
    %v1078 = vpack.c.b16 %v908, %v907
    %v1079 = vpack.c.b16 %v910, %v909
    %v1080 = vpack.c.b16 %v912, %v911
    %v1081 = vpack.c.b16 %v914, %v913
    %v1082 = vpack.c.b16 %v916, %v915
    %v1083 = vpack.c.b16 %v918, %v917
    %v1084 = vpack.c.b16 %v920, %v919
    %v1085 = vpack.c.b16 %v922, %v921
    %v1086 = vpack.c.b16 %v924, %v923
    %v1087 = vpack.c.b16 %v926, %v925
    %v1088 = vpack.c.b16 %v928, %v927
    %v1089 = vpack.c.b16 %v930, %v929
    %v1090 = vpack.c.b16 %v932, %v931
    %v1091 = vpack.c.b16 %v934, %v933
    %v1092 = vpack.c.b16 %v936, %v935
    %v1093 = vpack.c.b16 %v938, %v937
    %v1094 = vpack.c.b16 %v940, %v939
    %v1095 = vpack.c.b16 %v942, %v941
    %v1096 = vpack.c.b16 %v944, %v943
    %v1097 = vpack.c.b16 %v946, %v945
    %v1098 = vpack.c.b16 %v948, %v947
    %v1099 = vpack.c.b16 %v950, %v949
    %v1100 = vpack.c.b16 %v952, %v951
    %v1101 = vpack.c.b16 %v954, %v953
    %v1102 = vpack.c.b16 %v956, %v955
    %v1103 = vpack.c.b16 %v958, %v957
    %v1104 = vpack.c.b16 %v960, %v959
    %v1105 = vpack.c.b16 %v962, %v961
    %v1106 = vpack.c.b16 %v964, %v963
    %v1107 = vpack.c.b16 %v966, %v965
    %v1108 = vpack.c.b16 %v968, %v967
    %v1109 = vpack.c.b16 %v970, %v969
    %v1110 = vpack.c.b16 %v972, %v971
    %v1111 = vpack.c.b16 %v974, %v973
    %v1112 = vpack.c.b16 %v976, %v975
    %v1113 = vpack.c.b16 %v978, %v977
    %v1114 = vpack.c.b16 %v980, %v979
    %v1115 = vpack.c.b16 %v982, %v981
    %v1116 = vpack.c.b16 %v984, %v983
    %v1117 = vpack.c.b16 %v986, %v985
    %v1118 = vpack.c.b16 %v988, %v987
    %v1119 = vpack.c.b16 %v990, %v989
    %v1120 = vpack.c.b16 %v992, %v991
    %1249 = vmatprep.subr.bf16.mxu0 0
    %1250 = vmatpush1.bf16.msra.mxu0 %v993
    %1251 = vmatprep.subr.bf16.mxu0 0
    %1252 = vmatpush1.bf16.msra.mxu0 %v994
    %1253 = vmatprep.subr.bf16.mxu0 0
    %1254 = vmatpush1.bf16.msra.mxu0 %v995
    %1255 = vmatprep.subr.bf16.mxu0 0
    %1256 = vmatpush1.bf16.msra.mxu0 %v996
    %1257 = vmatprep.subr.bf16.mxu0 0
    %1258 = vmatpush1.bf16.msra.mxu0 %v997
    %1259 = vmatprep.subr.bf16.mxu0 0
    %1260 = vmatpush1.bf16.msra.mxu0 %v998
    %1261 = vmatprep.subr.bf16.mxu0 0
    %1262 = vmatpush1.bf16.msra.mxu0 %v999
    %1263 = vmatprep.subr.bf16.mxu0 0
    %1264 = vmatpush1.bf16.msra.mxu0 %v1000
    %1265 = vmatprep.subr.bf16.mxu0 0
    %1266 = vmatpush1.bf16.msra.mxu0 %v1001
    %1267 = vmatprep.subr.bf16.mxu0 0
    %1268 = vmatpush1.bf16.msra.mxu0 %v1002
    %1269 = vmatprep.subr.bf16.mxu0 0
    %1270 = vmatpush1.bf16.msra.mxu0 %v1003
    %1271 = vmatprep.subr.bf16.mxu0 0
    %1272 = vmatpush1.bf16.msra.mxu0 %v1004
    %1273 = vmatprep.subr.bf16.mxu0 0
    %1274 = vmatpush1.bf16.msra.mxu0 %v1005
    %1275 = vmatprep.subr.bf16.mxu0 0
    %1276 = vmatpush1.bf16.msra.mxu0 %v1006
    %1277 = vmatprep.subr.bf16.mxu0 0
    %1278 = vmatpush1.bf16.msra.mxu0 %v1007
    %1279 = vmatprep.subr.bf16.mxu0 0
    %1280 = vmatpush1.bf16.msra.mxu0 %v1008
    %1281 = vmatprep.mubr.bf16.mxu0 %v450
    %1282 = vmatmul.mubr.bf16.gmra.mrb[0].mxu0 %v449
    %v1283 = vpop.f32.mrb[0].mxu0
    %v1284 = vadd.f32 %v399, %v1283
    %v1285 = vpop.f32.mrb[0].mxu0
    %v1286 = vpop.f32.mrb[0].mxu0
    %v1287 = vadd.f32 %v399, %v1286
    %v1288 = vpop.f32.mrb[0].mxu0
    %1289 = vdwg.mxu0
    %1290 = vmatprep.subr.bf16.mxu0 0
    %1291 = vmatpush1.bf16.msra.mxu0 %v1009
    %1292 = vmatprep.subr.bf16.mxu0 0
    %1293 = vmatpush1.bf16.msra.mxu0 %v1010
    %1294 = vmatprep.subr.bf16.mxu0 0
    %1295 = vmatpush1.bf16.msra.mxu0 %v1011
    %1296 = vmatprep.subr.bf16.mxu0 0
    %1297 = vmatpush1.bf16.msra.mxu0 %v1012
    %1298 = vmatprep.subr.bf16.mxu0 0
    %1299 = vmatpush1.bf16.msra.mxu0 %v1013
    %1300 = vmatprep.subr.bf16.mxu0 0
    %1301 = vmatpush1.bf16.msra.mxu0 %v1014
    %1302 = vmatprep.subr.bf16.mxu0 0
    %1303 = vmatpush1.bf16.msra.mxu0 %v1015
    %1304 = vmatprep.subr.bf16.mxu0 0
    %1305 = vmatpush1.bf16.msra.mxu0 %v1016
    %1306 = vmatprep.subr.bf16.mxu0 0
    %1307 = vmatpush1.bf16.msra.mxu0 %v1017
    %1308 = vmatprep.subr.bf16.mxu0 0
    %1309 = vmatpush1.bf16.msra.mxu0 %v1018
    %1310 = vmatprep.subr.bf16.mxu0 0
    %1311 = vmatpush1.bf16.msra.mxu0 %v1019
    %1312 = vmatprep.subr.bf16.mxu0 0
    %1313 = vmatpush1.bf16.msra.mxu0 %v1020
    %1314 = vmatprep.subr.bf16.mxu0 0
    %1315 = vmatpush1.bf16.msra.mxu0 %v1021
    %1316 = vmatprep.subr.bf16.mxu0 0
    %1317 = vmatpush1.bf16.msra.mxu0 %v1022
    %1318 = vmatprep.subr.bf16.mxu0 0
    %1319 = vmatpush1.bf16.msra.mxu0 %v1023
    %1320 = vmatprep.subr.bf16.mxu0 0
    %1321 = vmatpush1.bf16.msra.mxu0 %v1024
    %1322 = vmatprep.mubr.bf16.mxu0 %v452
    %1323 = vmatmul.mubr.bf16.gmra.mrb[0].mxu0 %v451
    %v1324 = vpop.f32.mrb[0].mxu0
    %v1325 = vadd.f32 %v1284, %v1324
    %v1326 = vpop.f32.mrb[0].mxu0
    %v1327 = vpop.f32.mrb[0].mxu0
    %v1328 = vadd.f32 %v1287, %v1327
    %v1329 = vpop.f32.mrb[0].mxu0
    %1330 = vdwg.mxu0
    %1331 = vmatprep.subr.bf16.mxu0 0
    %1332 = vmatpush1.bf16.msra.mxu0 %v1025
    %1333 = vmatprep.subr.bf16.mxu0 0
    %1334 = vmatpush1.bf16.msra.mxu0 %v1026
    %1335 = vmatprep.subr.bf16.mxu0 0
    %1336 = vmatpush1.bf16.msra.mxu0 %v1027
    %1337 = vmatprep.subr.bf16.mxu0 0
    %1338 = vmatpush1.bf16.msra.mxu0 %v1028
    %1339 = vmatprep.subr.bf16.mxu0 0
    %1340 = vmatpush1.bf16.msra.mxu0 %v1029
    %1341 = vmatprep.subr.bf16.mxu0 0
    %1342 = vmatpush1.bf16.msra.mxu0 %v1030
    %1343 = vmatprep.subr.bf16.mxu0 0
    %1344 = vmatpush1.bf16.msra.mxu0 %v1031
    %1345 = vmatprep.subr.bf16.mxu0 0
    %1346 = vmatpush1.bf16.msra.mxu0 %v1032
    %1347 = vmatprep.subr.bf16.mxu0 0
    %1348 = vmatpush1.bf16.msra.mxu0 %v1033
    %1349 = vmatprep.subr.bf16.mxu0 0
    %1350 = vmatpush1.bf16.msra.mxu0 %v1034
    %1351 = vmatprep.subr.bf16.mxu0 0
    %1352 = vmatpush1.bf16.msra.mxu0 %v1035
    %1353 = vmatprep.subr.bf16.mxu0 0
    %1354 = vmatpush1.bf16.msra.mxu0 %v1036
    %1355 = vmatprep.subr.bf16.mxu0 0
    %1356 = vmatpush1.bf16.msra.mxu0 %v1037
    %1357 = vmatprep.subr.bf16.mxu0 0
    %1358 = vmatpush1.bf16.msra.mxu0 %v1038
    %1359 = vmatprep.subr.bf16.mxu0 0
    %1360 = vmatpush1.bf16.msra.mxu0 %v1039
    %1361 = vmatprep.subr.bf16.mxu0 0
    %1362 = vmatpush1.bf16.msra.mxu0 %v1040
    %1363 = vmatprep.mubr.bf16.mxu0 %v454
    %1364 = vmatmul.mubr.bf16.gmra.mrb[0].mxu0 %v453
    %v1365 = vpop.f32.mrb[0].mxu0
    %v1366 = vadd.f32 %v1325, %v1365
    %v1367 = vpop.f32.mrb[0].mxu0
    %v1368 = vpop.f32.mrb[0].mxu0
    %v1369 = vadd.f32 %v1328, %v1368
    %v1370 = vpop.f32.mrb[0].mxu0
    %1371 = vdwg.mxu0
    %1372 = vmatprep.subr.bf16.mxu0 0
    %1373 = vmatpush1.bf16.msra.mxu0 %v1041
    %1374 = vmatprep.subr.bf16.mxu0 0
    %1375 = vmatpush1.bf16.msra.mxu0 %v1042
    %1376 = vmatprep.subr.bf16.mxu0 0
    %1377 = vmatpush1.bf16.msra.mxu0 %v1043
    %1378 = vmatprep.subr.bf16.mxu0 0
    %1379 = vmatpush1.bf16.msra.mxu0 %v1044
    %1380 = vmatprep.subr.bf16.mxu0 0
    %1381 = vmatpush1.bf16.msra.mxu0 %v1045
    %1382 = vmatprep.subr.bf16.mxu0 0
    %1383 = vmatpush1.bf16.msra.mxu0 %v1046
    %1384 = vmatprep.subr.bf16.mxu0 0
    %1385 = vmatpush1.bf16.msra.mxu0 %v1047
    %1386 = vmatprep.subr.bf16.mxu0 0
    %1387 = vmatpush1.bf16.msra.mxu0 %v1048
    %1388 = vmatprep.subr.bf16.mxu0 0
    %1389 = vmatpush1.bf16.msra.mxu0 %v1049
    %1390 = vmatprep.subr.bf16.mxu0 0
    %1391 = vmatpush1.bf16.msra.mxu0 %v1050
    %1392 = vmatprep.subr.bf16.mxu0 0
    %1393 = vmatpush1.bf16.msra.mxu0 %v1051
    %1394 = vmatprep.subr.bf16.mxu0 0
    %1395 = vmatpush1.bf16.msra.mxu0 %v1052
    %1396 = vmatprep.subr.bf16.mxu0 0
    %1397 = vmatpush1.bf16.msra.mxu0 %v1053
    %1398 = vmatprep.subr.bf16.mxu0 0
    %1399 = vmatpush1.bf16.msra.mxu0 %v1054
    %1400 = vmatprep.subr.bf16.mxu0 0
    %1401 = vmatpush1.bf16.msra.mxu0 %v1055
    %1402 = vmatprep.subr.bf16.mxu0 0
    %1403 = vmatpush1.bf16.msra.mxu0 %v1056
    %1404 = vmatprep.mubr.bf16.mxu0 %v456
    %1405 = vmatmul.mubr.bf16.gmra.mrb[0].mxu0 %v455
    %v1406 = vpop.f32.mrb[0].mxu0
    %v1407 = vadd.f32 %v1366, %v1406
    %v1408 = vpop.f32.mrb[0].mxu0
    %v1409 = vpop.f32.mrb[0].mxu0
    %v1410 = vadd.f32 %v1369, %v1409
    %v1411 = vpop.f32.mrb[0].mxu0
    %1412 = vdwg.mxu0
    %1413 = vmatprep.subr.bf16.mxu0 0
    %1414 = vmatpush1.bf16.msra.mxu0 %v1057
    %1415 = vmatprep.subr.bf16.mxu0 0
    %1416 = vmatpush1.bf16.msra.mxu0 %v1058
    %1417 = vmatprep.subr.bf16.mxu0 0
    %1418 = vmatpush1.bf16.msra.mxu0 %v1059
    %1419 = vmatprep.subr.bf16.mxu0 0
    %1420 = vmatpush1.bf16.msra.mxu0 %v1060
    %1421 = vmatprep.subr.bf16.mxu0 0
    %1422 = vmatpush1.bf16.msra.mxu0 %v1061
    %1423 = vmatprep.subr.bf16.mxu0 0
    %1424 = vmatpush1.bf16.msra.mxu0 %v1062
    %1425 = vmatprep.subr.bf16.mxu0 0
    %1426 = vmatpush1.bf16.msra.mxu0 %v1063
    %1427 = vmatprep.subr.bf16.mxu0 0
    %1428 = vmatpush1.bf16.msra.mxu0 %v1064
    %1429 = vmatprep.subr.bf16.mxu0 0
    %1430 = vmatpush1.bf16.msra.mxu0 %v1065
    %1431 = vmatprep.subr.bf16.mxu0 0
    %1432 = vmatpush1.bf16.msra.mxu0 %v1066
    %1433 = vmatprep.subr.bf16.mxu0 0
    %1434 = vmatpush1.bf16.msra.mxu0 %v1067
    %1435 = vmatprep.subr.bf16.mxu0 0
    %1436 = vmatpush1.bf16.msra.mxu0 %v1068
    %1437 = vmatprep.subr.bf16.mxu0 0
    %1438 = vmatpush1.bf16.msra.mxu0 %v1069
    %1439 = vmatprep.subr.bf16.mxu0 0
    %1440 = vmatpush1.bf16.msra.mxu0 %v1070
    %1441 = vmatprep.subr.bf16.mxu0 0
    %1442 = vmatpush1.bf16.msra.mxu0 %v1071
    %1443 = vmatprep.subr.bf16.mxu0 0
    %1444 = vmatpush1.bf16.msra.mxu0 %v1072
    %1445 = vmatprep.mubr.bf16.mxu0 %v458
    %1446 = vmatmul.mubr.bf16.gmra.mrb[0].mxu0 %v457
    %v1447 = vpop.f32.mrb[0].mxu0
    %v1448 = vadd.f32 %v1407, %v1447
    %v1449 = vpop.f32.mrb[0].mxu0
    %v1450 = vpop.f32.mrb[0].mxu0
    %v1451 = vadd.f32 %v1410, %v1450
    %v1452 = vpop.f32.mrb[0].mxu0
    %1453 = vdwg.mxu0
    %1454 = vmatprep.subr.bf16.mxu0 0
    %1455 = vmatpush1.bf16.msra.mxu0 %v1073
    %1456 = vmatprep.subr.bf16.mxu0 0
    %1457 = vmatpush1.bf16.msra.mxu0 %v1074
    %1458 = vmatprep.subr.bf16.mxu0 0
    %1459 = vmatpush1.bf16.msra.mxu0 %v1075
    %1460 = vmatprep.subr.bf16.mxu0 0
    %1461 = vmatpush1.bf16.msra.mxu0 %v1076
    %1462 = vmatprep.subr.bf16.mxu0 0
    %1463 = vmatpush1.bf16.msra.mxu0 %v1077
    %1464 = vmatprep.subr.bf16.mxu0 0
    %1465 = vmatpush1.bf16.msra.mxu0 %v1078
    %1466 = vmatprep.subr.bf16.mxu0 0
    %1467 = vmatpush1.bf16.msra.mxu0 %v1079
    %1468 = vmatprep.subr.bf16.mxu0 0
    %1469 = vmatpush1.bf16.msra.mxu0 %v1080
    %1470 = vmatprep.subr.bf16.mxu0 0
    %1471 = vmatpush1.bf16.msra.mxu0 %v1081
    %1472 = vmatprep.subr.bf16.mxu0 0
    %1473 = vmatpush1.bf16.msra.mxu0 %v1082
    %1474 = vmatprep.subr.bf16.mxu0 0
    %1475 = vmatpush1.bf16.msra.mxu0 %v1083
    %1476 = vmatprep.subr.bf16.mxu0 0
    %1477 = vmatpush1.bf16.msra.mxu0 %v1084
    %1478 = vmatprep.subr.bf16.mxu0 0
    %1479 = vmatpush1.bf16.msra.mxu0 %v1085
    %1480 = vmatprep.subr.bf16.mxu0 0
    %1481 = vmatpush1.bf16.msra.mxu0 %v1086
    %1482 = vmatprep.subr.bf16.mxu0 0
    %1483 = vmatpush1.bf16.msra.mxu0 %v1087
    %1484 = vmatprep.subr.bf16.mxu0 0
    %1485 = vmatpush1.bf16.msra.mxu0 %v1088
    %1486 = vmatprep.mubr.bf16.mxu0 %v460
    %1487 = vmatmul.mubr.bf16.gmra.mrb[0].mxu0 %v459
    %v1488 = vpop.f32.mrb[0].mxu0
    %v1489 = vadd.f32 %v1448, %v1488
    %v1490 = vpop.f32.mrb[0].mxu0
    %v1491 = vpop.f32.mrb[0].mxu0
    %v1492 = vadd.f32 %v1451, %v1491
    %v1493 = vpop.f32.mrb[0].mxu0
    %1494 = vdwg.mxu0
    %1495 = vmatprep.subr.bf16.mxu0 0
    %1496 = vmatpush1.bf16.msra.mxu0 %v1089
    %1497 = vmatprep.subr.bf16.mxu0 0
    %1498 = vmatpush1.bf16.msra.mxu0 %v1090
    %1499 = vmatprep.subr.bf16.mxu0 0
    %1500 = vmatpush1.bf16.msra.mxu0 %v1091
    %1501 = vmatprep.subr.bf16.mxu0 0
    %1502 = vmatpush1.bf16.msra.mxu0 %v1092
    %1503 = vmatprep.subr.bf16.mxu0 0
    %1504 = vmatpush1.bf16.msra.mxu0 %v1093
    %1505 = vmatprep.subr.bf16.mxu0 0
    %1506 = vmatpush1.bf16.msra.mxu0 %v1094
    %1507 = vmatprep.subr.bf16.mxu0 0
    %1508 = vmatpush1.bf16.msra.mxu0 %v1095
    %1509 = vmatprep.subr.bf16.mxu0 0
    %1510 = vmatpush1.bf16.msra.mxu0 %v1096
    %1511 = vmatprep.subr.bf16.mxu0 0
    %1512 = vmatpush1.bf16.msra.mxu0 %v1097
    %1513 = vmatprep.subr.bf16.mxu0 0
    %1514 = vmatpush1.bf16.msra.mxu0 %v1098
    %1515 = vmatprep.subr.bf16.mxu0 0
    %1516 = vmatpush1.bf16.msra.mxu0 %v1099
    %1517 = vmatprep.subr.bf16.mxu0 0
    %1518 = vmatpush1.bf16.msra.mxu0 %v1100
    %1519 = vmatprep.subr.bf16.mxu0 0
    %1520 = vmatpush1.bf16.msra.mxu0 %v1101
    %1521 = vmatprep.subr.bf16.mxu0 0
    %1522 = vmatpush1.bf16.msra.mxu0 %v1102
    %1523 = vmatprep.subr.bf16.mxu0 0
    %1524 = vmatpush1.bf16.msra.mxu0 %v1103
    %1525 = vmatprep.subr.bf16.mxu0 0
    %1526 = vmatpush1.bf16.msra.mxu0 %v1104
    %1527 = vmatprep.mubr.bf16.mxu0 %v462
    %1528 = vmatmul.mubr.bf16.gmra.mrb[0].mxu0 %v461
    %v1529 = vpop.f32.mrb[0].mxu0
    %v1530 = vadd.f32 %v1489, %v1529
    %v1531 = vpop.f32.mrb[0].mxu0
    %v1532 = vpop.f32.mrb[0].mxu0
    %v1533 = vadd.f32 %v1492, %v1532
    %v1534 = vpop.f32.mrb[0].mxu0
    %1535 = vdwg.mxu0
    %1536 = vmatprep.subr.bf16.mxu0 0
    %1537 = vmatpush1.bf16.msra.mxu0 %v1105
    %1538 = vmatprep.subr.bf16.mxu0 0
    %1539 = vmatpush1.bf16.msra.mxu0 %v1106
    %1540 = vmatprep.subr.bf16.mxu0 0
    %1541 = vmatpush1.bf16.msra.mxu0 %v1107
    %1542 = vmatprep.subr.bf16.mxu0 0
    %1543 = vmatpush1.bf16.msra.mxu0 %v1108
    %1544 = vmatprep.subr.bf16.mxu0 0
    %1545 = vmatpush1.bf16.msra.mxu0 %v1109
    %1546 = vmatprep.subr.bf16.mxu0 0
    %1547 = vmatpush1.bf16.msra.mxu0 %v1110
    %1548 = vmatprep.subr.bf16.mxu0 0
    %1549 = vmatpush1.bf16.msra.mxu0 %v1111
    %1550 = vmatprep.subr.bf16.mxu0 0
    %1551 = vmatpush1.bf16.msra.mxu0 %v1112
    %1552 = vmatprep.subr.bf16.mxu0 0
    %1553 = vmatpush1.bf16.msra.mxu0 %v1113
    %1554 = vmatprep.subr.bf16.mxu0 0
    %1555 = vmatpush1.bf16.msra.mxu0 %v1114
    %1556 = vmatprep.subr.bf16.mxu0 0
    %1557 = vmatpush1.bf16.msra.mxu0 %v1115
    %1558 = vmatprep.subr.bf16.mxu0 0
    %1559 = vmatpush1.bf16.msra.mxu0 %v1116
    %1560 = vmatprep.subr.bf16.mxu0 0
    %1561 = vmatpush1.bf16.msra.mxu0 %v1117
    %1562 = vmatprep.subr.bf16.mxu0 0
    %1563 = vmatpush1.bf16.msra.mxu0 %v1118
    %1564 = vmatprep.subr.bf16.mxu0 0
    %1565 = vmatpush1.bf16.msra.mxu0 %v1119
    %1566 = vmatprep.subr.bf16.mxu0 0
    %1567 = vmatpush1.bf16.msra.mxu0 %v1120
    %1568 = vmatprep.mubr.bf16.mxu0 %v464
    %1569 = vmatmul.mubr.bf16.gmra.mrb[0].mxu0 %v463
    %v1570 = vpop.f32.mrb[0].mxu0
    %v1571 = vadd.f32 %v1530, %v1570
    %v1572 = vpop.f32.mrb[0].mxu0
    %v1573 = vpop.f32.mrb[0].mxu0
    %v1574 = vadd.f32 %v1533, %v1573
    %v1575 = vpop.f32.mrb[0].mxu0
    %1576 = vdwg.mxu0
    %v1577 = vmax.f32 %v1571, 0.0
    %v1578 = vmax.f32 %v1574, 0.0
    %v1579 = vpack.c.bf16 %v1578, %v1577
    %v1580 = vld [vmem:[#allocation7] sm:$0xf]
    %v1581 = vld [vmem:[#allocation7 + $0x4] sm:$0xf]
    %v1582 = vld [vmem:[#allocation7 + $0x8] sm:$0xf]
    %v1583 = vld [vmem:[#allocation7 + $0xc] sm:$0xf]
    %v1584 = vld [vmem:[#allocation7 + $0x10] sm:$0xf]
    %v1585 = vld [vmem:[#allocation7 + $0x14] sm:$0xf]
    %v1586 = vld [vmem:[#allocation7 + $0x18] sm:$0xf]
    %v1587 = vld [vmem:[#allocation7 + $0x1c] sm:$0xf]
    %v1588 = vld [vmem:[#allocation7 + $0x20] sm:$0xf]
    %v1589 = vld [vmem:[#allocation7 + $0x24] sm:$0xf]
    %v1590 = vld [vmem:[#allocation7 + $0x28] sm:$0xf]
    %v1591 = vld [vmem:[#allocation7 + $0x2c] sm:$0xf]
    %v1592 = vld [vmem:[#allocation7 + $0x30] sm:$0xf]
    %v1593 = vld [vmem:[#allocation7 + $0x34] sm:$0xf]
    %v1594 = vld [vmem:[#allocation7 + $0x38] sm:$0xf]
    %v1595 = vld [vmem:[#allocation7 + $0x3c] sm:$0xf]
    %v1596 = vld [vmem:[%s4] sm:$0x1]
    %v1598 = vlaneseq
    %v1599 = vshrl.u32 %v1598, 7
    %v1600 = vsub.s32 0, %v1599
    %v1601 = vrot.slane %v1596, %v1600
    %v1619 = vunpack.c.l.b16 %v1580
    %v1620 = vunpack.c.l.b16 %v1581
    %v1621 = vunpack.c.l.b16 %v1582
    %v1622 = vunpack.c.l.b16 %v1583
    %v1623 = vunpack.c.l.b16 %v1584
    %v1624 = vunpack.c.l.b16 %v1585
    %v1625 = vunpack.c.l.b16 %v1586
    %v1626 = vunpack.c.l.b16 %v1587
    %v1627 = vunpack.c.l.b16 %v1588
    %v1628 = vunpack.c.l.b16 %v1589
    %v1629 = vunpack.c.l.b16 %v1590
    %v1630 = vunpack.c.l.b16 %v1591
    %v1631 = vunpack.c.l.b16 %v1592
    %v1632 = vunpack.c.l.b16 %v1593
    %v1633 = vunpack.c.l.b16 %v1594
    %v1634 = vunpack.c.l.b16 %v1595
    %v1635 = vpack.c.b16 %v1620, %v1619
    %v1636 = vpack.c.b16 %v1622, %v1621
    %v1637 = vpack.c.b16 %v1624, %v1623
    %v1638 = vpack.c.b16 %v1626, %v1625
    %v1639 = vpack.c.b16 %v1628, %v1627
    %v1640 = vpack.c.b16 %v1630, %v1629
    %v1641 = vpack.c.b16 %v1632, %v1631
    %v1642 = vpack.c.b16 %v1634, %v1633
    %1651 = vmatprep.subr.bf16.mxu0 0
    %1652 = vmatpush1.bf16.msra.mxu0 %v1635
    %1653 = vmatprep.subr.bf16.mxu0 0
    %1654 = vmatpush1.bf16.msra.mxu0 %v1636
    %1655 = vmatprep.subr.bf16.mxu0 0
    %1656 = vmatpush1.bf16.msra.mxu0 %v1637
    %1657 = vmatprep.subr.bf16.mxu0 0
    %1658 = vmatpush1.bf16.msra.mxu0 %v1638
    %1659 = vmatprep.subr.bf16.mxu0 0
    %1660 = vmatpush1.bf16.msra.mxu0 %v1639
    %1661 = vmatprep.subr.bf16.mxu0 0
    %1662 = vmatpush1.bf16.msra.mxu0 %v1640
    %1663 = vmatprep.subr.bf16.mxu0 0
    %1664 = vmatpush1.bf16.msra.mxu0 %v1641
    %1665 = vmatprep.subr.bf16.mxu0 0
    %1666 = vmatpush1.bf16.msra.mxu0 %v1642
    %1667 = vmatprep.subr.bf16.mxu0 0
    %1668 = vmatpush1.bf16.msra.mxu0 0
    %1669 = vmatprep.subr.bf16.mxu0 0
    %1670 = vmatpush1.bf16.msra.mxu0 0
    %1671 = vmatprep.subr.bf16.mxu0 0
    %1672 = vmatpush1.bf16.msra.mxu0 0
    %1673 = vmatprep.subr.bf16.mxu0 0
    %1674 = vmatpush1.bf16.msra.mxu0 0
    %1675 = vmatprep.subr.bf16.mxu0 0
    %1676 = vmatpush1.bf16.msra.mxu0 0
    %1677 = vmatprep.subr.bf16.mxu0 0
    %1678 = vmatpush1.bf16.msra.mxu0 0
    %1679 = vmatprep.subr.bf16.mxu0 0
    %1680 = vmatpush1.bf16.msra.mxu0 0
    %1681 = vmatprep.subr.bf16.mxu0 0
    %1682 = vmatpush1.bf16.msra.mxu0 0
    %1683 = vmatprep.mubr.bf16.mxu0 0
    %1684 = vmatmul.mubr.bf16.gmra.mrb[0].mxu0 %v1579
    %v1685 = vpop.f32.mrb[0].mxu0
    %v1686 = vadd.f32 %v1601, %v1685
    %v1687 = vpop.f32.mrb[0].mxu0
    %v1688 = vpop.f32.mrb[0].mxu0
    %v1689 = vadd.f32 %v1601, %v1688
    %v1690 = vpop.f32.mrb[0].mxu0
    %1691 = vdwg.mxu0
    %v1692 = vmax.f32 %v1686, 0.0
    %v1693 = vmax.f32 %v1689, 0.0
    %v1694 = vpack.c.bf16 %v1693, %v1692
    %v1695 = vld [vmem:[#allocation8] sm:$0xf]
    %v1696 = vld [vmem:[#allocation8 + $0x4] sm:$0xf]
    %v1697 = vld [vmem:[#allocation8 + $0x8] sm:$0xf]
    %v1698 = vld [vmem:[#allocation8 + $0xc] sm:$0xf]
    %v1699 = vld [vmem:[#allocation8 + $0x10] sm:$0xf]
    %v1700 = vld [vmem:[#allocation8 + $0x14] sm:$0xf]
    %v1701 = vld [vmem:[#allocation8 + $0x18] sm:$0xf]
    %v1702 = vld [vmem:[#allocation8 + $0x1c] sm:$0xf]
    %v1703 = vld [vmem:[#allocation8 + $0x20] sm:$0xf]
    %v1704 = vld [vmem:[#allocation8 + $0x24] sm:$0xf]
    %v1705 = vld [vmem:[#allocation8 + $0x28] sm:$0xf]
    %v1706 = vld [vmem:[#allocation8 + $0x2c] sm:$0xf]
    %v1707 = vld [vmem:[#allocation8 + $0x30] sm:$0xf]
    %v1708 = vld [vmem:[#allocation8 + $0x34] sm:$0xf]
    %v1709 = vld [vmem:[#allocation8 + $0x38] sm:$0xf]
    %v1710 = vld [vmem:[#allocation8 + $0x3c] sm:$0xf]
    %v1711 = vld [vmem:[%s6] sm:$0x1]
    %v1713 = vlaneseq
    %v1714 = vshrl.u32 %v1713, 7
    %v1715 = vsub.s32 0, %v1714
    %v1716 = vrot.slane %v1711, %v1715
    %v1734 = vunpack.c.l.b16 %v1695
    %v1735 = vunpack.c.l.b16 %v1696
    %v1736 = vunpack.c.l.b16 %v1697
    %v1737 = vunpack.c.l.b16 %v1698
    %v1738 = vunpack.c.l.b16 %v1699
    %v1739 = vunpack.c.l.b16 %v1700
    %v1740 = vunpack.c.l.b16 %v1701
    %v1741 = vunpack.c.l.b16 %v1702
    %v1742 = vunpack.c.l.b16 %v1703
    %v1743 = vunpack.c.l.b16 %v1704
    %v1744 = vunpack.c.l.b16 %v1705
    %v1745 = vunpack.c.l.b16 %v1706
    %v1746 = vunpack.c.l.b16 %v1707
    %v1747 = vunpack.c.l.b16 %v1708
    %v1748 = vunpack.c.l.b16 %v1709
    %v1749 = vunpack.c.l.b16 %v1710
    %v1750 = vpack.c.b16 %v1735, %v1734
    %v1751 = vpack.c.b16 %v1737, %v1736
    %v1752 = vpack.c.b16 %v1739, %v1738
    %v1753 = vpack.c.b16 %v1741, %v1740
    %v1754 = vpack.c.b16 %v1743, %v1742
    %v1755 = vpack.c.b16 %v1745, %v1744
    %v1756 = vpack.c.b16 %v1747, %v1746
    %v1757 = vpack.c.b16 %v1749, %v1748
    %1766 = vmatprep.subr.bf16.mxu0 0
    %1767 = vmatpush1.bf16.msra.mxu0 %v1750
    %1768 = vmatprep.subr.bf16.mxu0 0
    %1769 = vmatpush1.bf16.msra.mxu0 %v1751
    %1770 = vmatprep.subr.bf16.mxu0 0
    %1771 = vmatpush1.bf16.msra.mxu0 %v1752
    %1772 = vmatprep.subr.bf16.mxu0 0
    %1773 = vmatpush1.bf16.msra.mxu0 %v1753
    %1774 = vmatprep.subr.bf16.mxu0 0
    %1775 = vmatpush1.bf16.msra.mxu0 %v1754
    %1776 = vmatprep.subr.bf16.mxu0 0
    %1777 = vmatpush1.bf16.msra.mxu0 %v1755
    %1778 = vmatprep.subr.bf16.mxu0 0
    %1779 = vmatpush1.bf16.msra.mxu0 %v1756
    %1780 = vmatprep.subr.bf16.mxu0 0
    %1781 = vmatpush1.bf16.msra.mxu0 %v1757
    %1782 = vmatprep.subr.bf16.mxu0 0
    %1783 = vmatpush1.bf16.msra.mxu0 0
    %1784 = vmatprep.subr.bf16.mxu0 0
    %1785 = vmatpush1.bf16.msra.mxu0 0
    %1786 = vmatprep.subr.bf16.mxu0 0
    %1787 = vmatpush1.bf16.msra.mxu0 0
    %1788 = vmatprep.subr.bf16.mxu0 0
    %1789 = vmatpush1.bf16.msra.mxu0 0
    %1790 = vmatprep.subr.bf16.mxu0 0
    %1791 = vmatpush1.bf16.msra.mxu0 0
    %1792 = vmatprep.subr.bf16.mxu0 0
    %1793 = vmatpush1.bf16.msra.mxu0 0
    %1794 = vmatprep.subr.bf16.mxu0 0
    %1795 = vmatpush1.bf16.msra.mxu0 0
    %1796 = vmatprep.subr.bf16.mxu0 0
    %1797 = vmatpush1.bf16.msra.mxu0 0
    %1798 = vmatprep.mubr.bf16.mxu0 0
    %1799 = vmatmul.mubr.bf16.gmra.mrb[0].mxu0 %v1694
    %v1800 = vpop.f32.mrb[0].mxu0
    %v1801 = vadd.f32 %v1716, %v1800
    %v1802 = vpop.f32.mrb[0].mxu0
    %v1803 = vpop.f32.mrb[0].mxu0
    %v1804 = vadd.f32 %v1716, %v1803
    %v1805 = vpop.f32.mrb[0].mxu0
    %1806 = vdwg.mxu0
    %v1807 = vmax.f32 %v1801, 0.0
    %v1808 = vmax.f32 %v1804, 0.0
    %v1809 = vpack.c.bf16 %v1808, %v1807
    %v1810 = vld [vmem:[#allocation10] sm:$0xf]
    %v1811 = vld [vmem:[#allocation10 + $0x4] sm:$0xf]
    %v1812 = vld [vmem:[#allocation10 + $0x8] sm:$0xf]
    %v1813 = vld [vmem:[#allocation10 + $0xc] sm:$0xf]
    %v1814 = vld [vmem:[#allocation10 + $0x10] sm:$0xf]
    %v1815 = vld [vmem:[#allocation10 + $0x14] sm:$0xf]
    %v1816 = vld [vmem:[#allocation10 + $0x18] sm:$0xf]
    %v1817 = vld [vmem:[#allocation10 + $0x1c] sm:$0xf]
    %v1818 = vld [vmem:[#allocation10 + $0x20] sm:$0xf]
    %v1819 = vld [vmem:[#allocation10 + $0x24] sm:$0xf]
    %v1820 = vld [vmem:[#allocation10 + $0x28] sm:$0xf]
    %v1821 = vld [vmem:[#allocation10 + $0x2c] sm:$0xf]
    %v1822 = vld [vmem:[#allocation10 + $0x30] sm:$0xf]
    %v1823 = vld [vmem:[#allocation10 + $0x34] sm:$0xf]
    %v1824 = vld [vmem:[#allocation10 + $0x38] sm:$0xf]
    %v1825 = vld [vmem:[#allocation10 + $0x3c] sm:$0xf]
    %v1826 = vld [vmem:[%s8] sm:$0x1]
    %v1828 = vlaneseq
    %v1829 = vshrl.u32 %v1828, 7
    %v1830 = vsub.s32 0, %v1829
    %v1831 = vrot.slane %v1826, %v1830
    %v1849 = vunpack.c.l.b16 %v1810
    %v1850 = vunpack.c.l.b16 %v1811
    %v1851 = vunpack.c.l.b16 %v1812
    %v1852 = vunpack.c.l.b16 %v1813
    %v1853 = vunpack.c.l.b16 %v1814
    %v1854 = vunpack.c.l.b16 %v1815
    %v1855 = vunpack.c.l.b16 %v1816
    %v1856 = vunpack.c.l.b16 %v1817
    %v1857 = vunpack.c.l.b16 %v1818
    %v1858 = vunpack.c.l.b16 %v1819
    %v1859 = vunpack.c.l.b16 %v1820
    %v1860 = vunpack.c.l.b16 %v1821
    %v1861 = vunpack.c.l.b16 %v1822
    %v1862 = vunpack.c.l.b16 %v1823
    %v1863 = vunpack.c.l.b16 %v1824
    %v1864 = vunpack.c.l.b16 %v1825
    %v1865 = vpack.c.b16 %v1850, %v1849
    %v1866 = vpack.c.b16 %v1852, %v1851
    %v1867 = vpack.c.b16 %v1854, %v1853
    %v1868 = vpack.c.b16 %v1856, %v1855
    %v1869 = vpack.c.b16 %v1858, %v1857
    %v1870 = vpack.c.b16 %v1860, %v1859
    %v1871 = vpack.c.b16 %v1862, %v1861
    %v1872 = vpack.c.b16 %v1864, %v1863
    %1881 = vmatprep.subr.bf16.mxu0 0
    %1882 = vmatpush1.bf16.msra.mxu0 %v1865
    %1883 = vmatprep.subr.bf16.mxu0 0
    %1884 = vmatpush1.bf16.msra.mxu0 %v1866
    %1885 = vmatprep.subr.bf16.mxu0 0
    %1886 = vmatpush1.bf16.msra.mxu0 %v1867
    %1887 = vmatprep.subr.bf16.mxu0 0
    %1888 = vmatpush1.bf16.msra.mxu0 %v1868
    %1889 = vmatprep.subr.bf16.mxu0 0
    %1890 = vmatpush1.bf16.msra.mxu0 %v1869
    %1891 = vmatprep.subr.bf16.mxu0 0
    %1892 = vmatpush1.bf16.msra.mxu0 %v1870
    %1893 = vmatprep.subr.bf16.mxu0 0
    %1894 = vmatpush1.bf16.msra.mxu0 %v1871
    %1895 = vmatprep.subr.bf16.mxu0 0
    %1896 = vmatpush1.bf16.msra.mxu0 %v1872
    %1897 = vmatprep.subr.bf16.mxu0 0
    %1898 = vmatpush1.bf16.msra.mxu0 0
    %1899 = vmatprep.subr.bf16.mxu0 0
    %1900 = vmatpush1.bf16.msra.mxu0 0
    %1901 = vmatprep.subr.bf16.mxu0 0
    %1902 = vmatpush1.bf16.msra.mxu0 0
    %1903 = vmatprep.subr.bf16.mxu0 0
    %1904 = vmatpush1.bf16.msra.mxu0 0
    %1905 = vmatprep.subr.bf16.mxu0 0
    %1906 = vmatpush1.bf16.msra.mxu0 0
    %1907 = vmatprep.subr.bf16.mxu0 0
    %1908 = vmatpush1.bf16.msra.mxu0 0
    %1909 = vmatprep.subr.bf16.mxu0 0
    %1910 = vmatpush1.bf16.msra.mxu0 0
    %1911 = vmatprep.subr.bf16.mxu0 0
    %1912 = vmatpush1.bf16.msra.mxu0 0
    %1913 = vmatprep.mubr.bf16.mxu0 0
    %1914 = vmatmul.mubr.bf16.gmra.mrb[0].mxu0 %v1809
    %v1915 = vpop.f32.mrb[0].mxu0
    %v1916 = vadd.f32 %v1831, %v1915
    %v1917 = vpop.f32.mrb[0].mxu0
    %v1918 = vpop.f32.mrb[0].mxu0
    %v1919 = vadd.f32 %v1831, %v1918
    %v1920 = vpop.f32.mrb[0].mxu0
    %1921 = vdwg.mxu0
    %v1922 = vmax.f32 %v1916, 0.0
    %v1923 = vmax.f32 %v1919, 0.0
    %v1924 = vpack.c.bf16 %v1923, %v1922
    %v1925 = vld [vmem:[#allocation11] sm:$0xf]
    %v1926 = vld [vmem:[#allocation11 + $0x4] sm:$0xf]
    %v1927 = vld [vmem:[#allocation11 + $0x8] sm:$0xf]
    %v1928 = vld [vmem:[#allocation11 + $0xc] sm:$0xf]
    %v1929 = vld [vmem:[#allocation11 + $0x10] sm:$0xf]
    %v1930 = vld [vmem:[#allocation11 + $0x14] sm:$0xf]
    %v1931 = vld [vmem:[#allocation11 + $0x18] sm:$0xf]
    %v1932 = vld [vmem:[#allocation11 + $0x1c] sm:$0xf]
    %v1933 = vld [vmem:[#allocation11 + $0x20] sm:$0xf]
    %v1934 = vld [vmem:[#allocation11 + $0x24] sm:$0xf]
    %v1935 = vld [vmem:[#allocation11 + $0x28] sm:$0xf]
    %v1936 = vld [vmem:[#allocation11 + $0x2c] sm:$0xf]
    %v1937 = vld [vmem:[#allocation11 + $0x30] sm:$0xf]
    %v1938 = vld [vmem:[#allocation11 + $0x34] sm:$0xf]
    %v1939 = vld [vmem:[#allocation11 + $0x38] sm:$0xf]
    %v1940 = vld [vmem:[#allocation11 + $0x3c] sm:$0xf]
    %v1941 = vld [vmem:[%s10] sm:$0x1]
    %v1943 = vlaneseq
    %v1944 = vshrl.u32 %v1943, 7
    %v1945 = vsub.s32 0, %v1944
    %v1946 = vrot.slane %v1941, %v1945
    %v1964 = vunpack.c.l.b16 %v1925
    %v1965 = vunpack.c.l.b16 %v1926
    %v1966 = vunpack.c.l.b16 %v1927
    %v1967 = vunpack.c.l.b16 %v1928
    %v1968 = vunpack.c.l.b16 %v1929
    %v1969 = vunpack.c.l.b16 %v1930
    %v1970 = vunpack.c.l.b16 %v1931
    %v1971 = vunpack.c.l.b16 %v1932
    %v1972 = vunpack.c.l.b16 %v1933
    %v1973 = vunpack.c.l.b16 %v1934
    %v1974 = vunpack.c.l.b16 %v1935
    %v1975 = vunpack.c.l.b16 %v1936
    %v1976 = vunpack.c.l.b16 %v1937
    %v1977 = vunpack.c.l.b16 %v1938
    %v1978 = vunpack.c.l.b16 %v1939
    %v1979 = vunpack.c.l.b16 %v1940
    %v1980 = vpack.c.b16 %v1965, %v1964
    %v1981 = vpack.c.b16 %v1967, %v1966
    %v1982 = vpack.c.b16 %v1969, %v1968
    %v1983 = vpack.c.b16 %v1971, %v1970
    %v1984 = vpack.c.b16 %v1973, %v1972
    %v1985 = vpack.c.b16 %v1975, %v1974
    %v1986 = vpack.c.b16 %v1977, %v1976
    %v1987 = vpack.c.b16 %v1979, %v1978
    %1996 = vmatprep.subr.bf16.mxu0 0
    %1997 = vmatpush1.bf16.msra.mxu0 %v1980
    %1998 = vmatprep.subr.bf16.mxu0 0
    %1999 = vmatpush1.bf16.msra.mxu0 %v1981
    %2000 = vmatprep.subr.bf16.mxu0 0
    %2001 = vmatpush1.bf16.msra.mxu0 %v1982
    %2002 = vmatprep.subr.bf16.mxu0 0
    %2003 = vmatpush1.bf16.msra.mxu0 %v1983
    %2004 = vmatprep.subr.bf16.mxu0 0
    %2005 = vmatpush1.bf16.msra.mxu0 %v1984
    %2006 = vmatprep.subr.bf16.mxu0 0
    %2007 = vmatpush1.bf16.msra.mxu0 %v1985
    %2008 = vmatprep.subr.bf16.mxu0 0
    %2009 = vmatpush1.bf16.msra.mxu0 %v1986
    %2010 = vmatprep.subr.bf16.mxu0 0
    %2011 = vmatpush1.bf16.msra.mxu0 %v1987
    %2012 = vmatprep.subr.bf16.mxu0 0
    %2013 = vmatpush1.bf16.msra.mxu0 0
    %2014 = vmatprep.subr.bf16.mxu0 0
    %2015 = vmatpush1.bf16.msra.mxu0 0
    %2016 = vmatprep.subr.bf16.mxu0 0
    %2017 = vmatpush1.bf16.msra.mxu0 0
    %2018 = vmatprep.subr.bf16.mxu0 0
    %2019 = vmatpush1.bf16.msra.mxu0 0
    %2020 = vmatprep.subr.bf16.mxu0 0
    %2021 = vmatpush1.bf16.msra.mxu0 0
    %2022 = vmatprep.subr.bf16.mxu0 0
    %2023 = vmatpush1.bf16.msra.mxu0 0
    %2024 = vmatprep.subr.bf16.mxu0 0
    %2025 = vmatpush1.bf16.msra.mxu0 0
    %2026 = vmatprep.subr.bf16.mxu0 0
    %2027 = vmatpush1.bf16.msra.mxu0 0
    %2028 = vmatprep.mubr.bf16.mxu0 0
    %2029 = vmatmul.mubr.bf16.gmra.mrb[0].mxu0 %v1924
    %v2030 = vpop.f32.mrb[0].mxu0
    %v2031 = vadd.f32 %v1946, %v2030
    %v2032 = vpop.f32.mrb[0].mxu0
    %v2033 = vpop.f32.mrb[0].mxu0
    %v2034 = vadd.f32 %v1946, %v2033
    %v2035 = vpop.f32.mrb[0].mxu0
    %2036 = vdwg.mxu0
    %v2037 = vmax.f32 %v2031, -30.0
    %v2038 = vmax.f32 %v2034, -30.0
    %v2039 = vmin.f32 %v2037, 30.0
    %v2040 = vmin.f32 %v2038, 30.0
    %v2041 = vsub.f32 0.0, %v2039
    %v2042 = vsub.f32 0.0, %v2040
    %v2043 = vmul.f32 %v2041, 1.442695
    %v2044 = vpow.pop %v2043
    %v2045 = vmul.f32 %v2042, 1.442695
    %v2046 = vpow.pop %v2045
    %v2047 = vadd.f32 %v2044, 1.0
    %v2048 = vadd.f32 %v2046, 1.0
    %v2049 = vrcp.pop %v2047
    %v2050 = vrcp.pop %v2048
    %2051 = vst [vmem:[#allocation13] sm:$0xff] %v2049
    %2052 = vst [vmem:[#allocation13 + $0x8] sm:$0xff] %v2050
    // Predicated region
    $region70: #{tpu_custom_call.1} parent=1 // pred_check
      _
    $region71: #{tpu_custom_call.1} parent=1 // pred_check_branch
      %2054 = sbr.rel (0) target = $region73
    $region72: #{tpu_custom_call.1} parent=1 // pred_region
      %s2056 = ssub.s32 256, 256
      %2057 = vsyncadd [#allocation4], %s2056
      %s2058 = sshll.u32 [#allocation13], 4
      %s2059 = int_to_ptr.vmem [resolvable:$true] %s2058
      %2064 = dma.vmem_to_hbm [thread:$0]  %s2059, 256, %s11, [#allocation4], 128, 128, 8
    $region73: #{tpu_custom_call.1} parent=1 // pred_fallthru
      _
    // Predicated region
    $region74: #{tpu_custom_call.1} parent=1 // pred_check
      _
    $region75: #{tpu_custom_call.1} parent=1 // pred_check_branch
      %2066 = sbr.rel (0) target = $region77
    $region76: #{tpu_custom_call.1} parent=1 // pred_region
      %2067 = dma.done [#allocation4], 256
    $region77: #{tpu_custom_call.1} parent=1 // pred_fallthru
      _
    %2068 = vsyncpa [#allocation3], 1
    %2069 = vsyncpa [#allocation6], 1
    %2070 = vsyncpa [#allocation9], 1
    %2071 = vsyncpa [#allocation12], 1
    %2072 = vsyncpa [#allocation4], 1

</llo_original>
